<compile_context>
chip_gen: v7x
topology: tpu7x:2x2x1
jax: 0.10.0
libtpu: 0.0.40
codegen_flags: <defaults>
</compile_context>

<pallas_src>
from functools import partial

import jax
import jax.numpy as jnp
from jax.experimental import pallas as pl
from jax.experimental.pallas import tpu as pltpu


def _crop_kernel(x_ref, o_ref, *, cutoff_flat, tc):
    """One (tn, tc) block of the flattened (n, H*W) image batch."""
    c = pl.program_id(1)
    col0 = c * tc  # global flattened-column offset of this block

    @pl.when(col0 + tc <= cutoff_flat)
    def _zero_block():
        # Block lies entirely in the cropped-out region: pure write, input never read
        # (its input DMA was remapped/elided in the wrapper).
        o_ref[...] = jnp.zeros_like(o_ref)

    @pl.when(col0 + tc > cutoff_flat)
    def _masked_copy():
        x = x_ref[...]
        col = col0 + jax.lax.broadcasted_iota(jnp.int32, x.shape, x.ndim - 1)
        # Multiply by an exact 0.0/1.0 mask (not jnp.where) so the kept / straddling
        # region matches PyTorch's X * crop_matrix bit-for-bit (incl. NaN*0 -> NaN).
        # Compute is free filler here; the kernel is HBM-bandwidth bound.
        o_ref[...] = x * (col >= cutoff_flat).astype(x.dtype)


def _vmem_budget_bytes():
    """Generation-gated total VMEM working-set budget (in + out, double buffered)."""
    try:
        kind = jax.devices()[0].device_kind.lower()
    except Exception:
        kind = ""
    if ("v5" in kind) or ("v6" in kind):
        return 96 * 1024 * 1024   # 128 MiB physical VMEM on v5e / v6e
    return 48 * 1024 * 1024       # conservative default; v7x has only 64 MiB physical


def _pick_col_tile(hw, cutoff_flat):
    """Largest 128-multiple divisor of hw that is <= cutoff_flat (so >=1 fully-cropped
    column block whose input read can be elided).  Falls back to the whole row."""
    if hw % 128 != 0 or cutoff_flat < 256:
        return hw
    best = 128
    for d in range(1, hw // 128 + 1):
        t = d * 128
        if hw % t == 0 and t <= cutoff_flat:
            best = t
    return best


def crop_forward(x, horizon):
    """Pallas equivalent of CropKernel.forward for X of shape (..., H, W)."""
    orig_shape = x.shape
    h, w = orig_shape[-2], orig_shape[-1]
    assert 0 <= horizon <= h
    n = 1
    for d in orig_shape[:-2]:
        n *= d
    n = max(n, 1)
    hw = h * w
    cutoff = h - horizon          # rows [0, cutoff) are zeroed, rows [cutoff, h) kept
    cutoff_flat = cutoff * w      # flattened-column boundary of the cropped region
    itemsize = jnp.dtype(x.dtype).itemsize

    # Lane-dense view: full image rows packed along the 128-lane axis.
    xf = x.reshape(n, hw)

    budget = _vmem_budget_bytes()
    block_bytes = budget // 4     # input + output, each double-buffered by the pipeline

    # Column tiling along the flattened axis (always a multiple of 128 when tiled).
    tc = _pick_col_tile(hw, cutoff_flat)
    grid_c = hw // tc

    # Leading-axis tile: as large as the budget allows, multiple of 8 (or the full dim).
    tn_cap = max(1, block_bytes // (tc * itemsize))
    if tn_cap >= n:
        tn = n
        if n >= 16:
            # Manufacture >=2 steps on the parallel axis so v7x's 2 TensorCores share work.
            tn = max(8, (((n + 1) // 2) // 8) * 8)
    else:
        tn = min(n, max(8, (tn_cap // 8) * 8))
    grid_n = pl.cdiv(n, tn)

    # Input blocks that are fully cropped out are remapped to the first needed block so
    # consecutive identical block indices let the pipeline skip their HBM reads.
    first_needed = min(cutoff_flat // tc, grid_c - 1)

    in_spec = pl.BlockSpec((tn, tc), lambda i, c: (i, jnp.maximum(c, first_needed)))
    out_spec = pl.BlockSpec((tn, tc), lambda i, c: (i, c))

    out = pl.pallas_call(
        partial(_crop_kernel, cutoff_flat=cutoff_flat, tc=tc),
        out_shape=jax.ShapeDtypeStruct((n, hw), x.dtype),
        grid=(grid_n, grid_c),
        in_specs=[in_spec],
        out_specs=out_spec,
        compiler_params=pltpu.CompilerParams(
            dimension_semantics=("parallel", "arbitrary"),
            vmem_limit_bytes=budget,
        ),
        cost_estimate=pl.CostEstimate(
            flops=0, transcendentals=0, bytes_accessed=2 * n * hw * itemsize
        ),
    )(xf)
    return out.reshape(orig_shape)


def make_crop_matrix(channels, horizon, size=224, dtype=jnp.float32):
    # Reference-only: materialize the buffer exactly like the PyTorch module does.
    return jnp.concatenate(
        [jnp.zeros((channels, size - horizon, size), dtype),
         jnp.ones((channels, horizon, size), dtype)],
        axis=1,
    )


if __name__ == "__main__":
    B, C, SIZE = 2, 3, 224          # the module hard-codes 224x224 images
    HORIZON = 100

    key = jax.random.PRNGKey(0)
    x = jax.random.normal(key, (B, C, SIZE, SIZE), jnp.float32)

    fwd = jax.jit(partial(crop_forward, horizon=HORIZON))
    y = jax.block_until_ready(fwd(x))

    # Reference: exactly the PyTorch forward, X * crop_matrix (broadcast over batch).
    y_ref = x * make_crop_matrix(C, HORIZON, SIZE)[None]

    assert y.shape == x.shape and y.dtype == x.dtype
    assert bool(jnp.array_equal(y, y_ref)), "mismatch vs reference crop"
    print("KERNEL_OK")
</pallas_src>

<mosaic_0001>
module attributes {stable_mosaic.version = 11 : i64} {
  func.func @_crop_kernel(%arg0: i32, %arg1: i32, %arg2: memref<6x25088xf32, #tpu.memory_space<vmem>>, %arg3: memref<6x25088xf32, #tpu.memory_space<vmem>>) attributes {dimension_semantics = [#tpu.dimension_semantics<parallel>, #tpu.dimension_semantics<arbitrary>], iteration_bounds = array<i64: 1, 2>, scalar_prefetch = 0 : i64, scratch_operands = 0 : i64, tpu.core_type = #tpu.core_type<tc>, window_params = [{transform_indices = @transform_0, window_bounds = array<i64: 6, 25088>}, {transform_indices = @transform_1, window_bounds = array<i64: 6, 25088>}]} {
    %c25088_i32 = arith.constant 25088 : i32
    %0 = arith.muli %arg1, %c25088_i32 : i32
    %c25088_i32_0 = arith.constant 25088 : i32
    %1 = arith.addi %0, %c25088_i32_0 : i32
    %c27776_i32 = arith.constant 27776 : i32
    %2 = arith.cmpi sle, %1, %c27776_i32 : i32
    %3 = arith.extui %2 : i1 to i32
    %c0_i32 = arith.constant 0 : i32
    %4 = arith.cmpi ne, %3, %c0_i32 : i32
    scf.if %4 {
      %cst = arith.constant 0.000000e+00 : f32
      %9 = vector.broadcast %cst : f32 to vector<6x25088xf32>
      %c0 = arith.constant 0 : index
      %c0_4 = arith.constant 0 : index
      %10 = vector.load %arg3[%c0, %c0_4] : memref<6x25088xf32, #tpu.memory_space<vmem>>, vector<6x25088xf32>
      tpu.vector_store %arg3[%c0, %c0_4], %9 {strides = array<i32>} : memref<6x25088xf32, #tpu.memory_space<vmem>>, vector<6x25088xf32>,
    } else {
    }
    %c25088_i32_1 = arith.constant 25088 : i32
    %5 = arith.addi %0, %c25088_i32_1 : i32
    %c27776_i32_2 = arith.constant 27776 : i32
    %6 = arith.cmpi sgt, %5, %c27776_i32_2 : i32
    %7 = arith.extui %6 : i1 to i32
    %c0_i32_3 = arith.constant 0 : i32
    %8 = arith.cmpi ne, %7, %c0_i32_3 : i32
    scf.if %8 {
      %c0 = arith.constant 0 : index
      %c0_4 = arith.constant 0 : index
      %9 = vector.load %arg2[%c0, %c0_4] : memref<6x25088xf32, #tpu.memory_space<vmem>>, vector<6x25088xf32>
      %10 = tpu.iota {dimensions = array<i32: 1>} : vector<6x25088xi32>
      %11 = vector.broadcast %0 : i32 to vector<6x25088xi32>
      %12 = arith.addi %11, %10 : vector<6x25088xi32>
      %c27776_i32_5 = arith.constant 27776 : i32
      %13 = vector.broadcast %c27776_i32_5 : i32 to vector<6x25088xi32>
      %14 = arith.cmpi sge, %12, %13 : vector<6x25088xi32>
      %15 = arith.extui %14 : vector<6x25088xi1> to vector<6x25088xi32>
      %16 = arith.sitofp %15 : vector<6x25088xi32> to vector<6x25088xf32>
      %17 = arith.mulf %9, %16 : vector<6x25088xf32>
      %c0_6 = arith.constant 0 : index
      %c0_7 = arith.constant 0 : index
      %18 = vector.load %arg3[%c0_6, %c0_7] : memref<6x25088xf32, #tpu.memory_space<vmem>>, vector<6x25088xf32>
      tpu.vector_store %arg3[%c0_6, %c0_7], %17 {strides = array<i32>} : memref<6x25088xf32, #tpu.memory_space<vmem>>, vector<6x25088xf32>,
    } else {
    }
    return
  }
  func.func @transform_0(%arg0: i32, %arg1: i32) -> (i32, i32) {
    %c1_i32 = arith.constant 1 : i32
    %0 = arith.maxsi %arg1, %c1_i32 : i32
    %c0_i32 = arith.constant 0 : i32
    return %arg0, %0 : i32, i32
  }
  func.func @transform_1(%arg0: i32, %arg1: i32) -> (i32, i32) {
    %c0_i32 = arith.constant 0 : i32
    return %arg0, %arg1 : i32, i32
  }
}

</mosaic_0001>

<llo_original>
// kernel: crop_forward.1
$region0: #{crop_forward.1}
  #allocation0 [shape = 'u32[]', space=smem, size = 0x4, offset = 0x4, fixed_abs, tag = 'smem constant byte address 0x4 - core index']
  #allocation1 [shape = 'u32[144,128]{1,0:T(1,128)}', space=vmem, size = 0x12000, scoped, tag = 'internal scratch']
  %s0 = inlined_call_operand.vmem [shape: f32[6,50176], index: 0, kind: input, shape index: {}]
  %s1 = inlined_call_operand.vmem [shape: f32[6,50176], index: 1, kind: output, shape index: {}]
  %s2 = sld [smem:[#allocation0]]
  $region45: #{crop_forward.1} parent=0
    _
  %s4 = ssub.s32 1, %s2
  %s5 = scalar_select 0, %s4, %s2
  loop: start=0, step=1, limit=4
  $region2: #{crop_forward.1} parent=0 // loop_pre_header
    _
  $region3: #{crop_forward.1} parent=0 // loop_header
    %s7 = sphi 0, %s11
    %p8 = scmp.ge.s32.totalorder %s7, 4
    %s14 = sphi 0, %s26
    %s15 = sphi 0, %s22
    %s16 = sphi 0, %s14
    %s17 = sphi 0, %s15
    %s18 = sphi 0, %s16
    %s19 = sphi 0, %s17
    %s35 = sphi 0, %s37
    %s38 = sphi 0, %s35
    %s39 = sphi 0, %s38
    %s55 = sphi 0, %s39
    %s63 = sphi 0, %s65
    %s66 = sphi 0, %s63
    %s67 = sphi 0, %s66
    %s83 = sphi 0, %s67
  $region4: #{crop_forward.1} parent=0 // loop_header_branch
    %10 = sbr.rel (%p8) target = $region8
  $region5: #{crop_forward.1} parent=0 // loop_body
    %s12 = ssub.s32 %s7, 1
    %s13 = ssub.s32 %s7, 2
    %s20 = sadd.s32 1, %s15
    %p21 = scmp.ge.s32.totalorder %s20, 2
    %s22 = scalar_select %p21, 0, %s20
    %s23 = sadd.s32 1, %s14
    %s24 = scalar_select %p21, %s23, %s14
    %p25 = scmp.ge.s32.totalorder %s24, 1
    %s26 = scalar_select %p25, 0, %s24
    %p27 = scmp.gt.s32.totalorder %s15, 1
    %s28 = scalar_select %p27, %s15, 1
    %p29 = scmp.gt.s32.totalorder %s22, 1
    %s30 = scalar_select %p29, %s22, 1
    %s31 = ssub.s32 %s14, %s26
    %s32 = ssub.s32 %s28, %s30
    %s33 = sor.u32 %s31, %s32
    %p34 = scmp.eq.s32.totalorder %s33, 0
    %s36 = sadd.s32 %s35, 1
    %s37 = scalar_select %p34, %s35, %s36
    %p40 = pneg %p34
    %p41 = scmp.eq.s32.totalorder %s7, 1
    %p42 = por %p40, %p41
    %p43 = scmp.ne.s32.totalorder %s35, %s38
    %p44 = scmp.eq.s32.totalorder %s7, 0
    %p45 = por %p43, %p44
    %p46 = scmp.ne.s32.totalorder %s35, %s38
    %p47 = scmp.eq.s32.totalorder %s12, 1
    %p48 = por %p46, %p47
    %p49 = scmp.ne.s32.totalorder %s38, %s39
    %p50 = scmp.eq.s32.totalorder %s12, 0
    %p51 = por %p49, %p50
    %p52 = scmp.ne.s32.totalorder %s38, %s39
    %p53 = scmp.eq.s32.totalorder %s13, 1
    %p54 = por %p52, %p53
    %p56 = scmp.ne.s32.totalorder %s39, %s55
    %p57 = scmp.eq.s32.totalorder %s13, 0
    %p58 = por %p56, %p57
    %s59 = ssub.s32 %s14, %s26
    %s60 = ssub.s32 %s15, %s22
    %s61 = sor.u32 %s59, %s60
    %p62 = scmp.eq.s32.totalorder %s61, 0
    %s64 = sadd.s32 %s63, 1
    %s65 = scalar_select %p62, %s63, %s64
    %p68 = pneg %p62
    %p69 = scmp.eq.s32.totalorder %s7, 1
    %p70 = por %p68, %p69
    %p71 = scmp.ne.s32.totalorder %s63, %s66
    %p72 = scmp.eq.s32.totalorder %s7, 0
    %p73 = por %p71, %p72
    %p74 = scmp.ne.s32.totalorder %s63, %s66
    %p75 = scmp.eq.s32.totalorder %s12, 1
    %p76 = por %p74, %p75
    %p77 = scmp.ne.s32.totalorder %s66, %s67
    %p78 = scmp.eq.s32.totalorder %s12, 0
    %p79 = por %p77, %p78
    %p80 = scmp.ne.s32.totalorder %s66, %s67
    %p81 = scmp.eq.s32.totalorder %s13, 1
    %p82 = por %p80, %p81
    %p84 = scmp.ne.s32.totalorder %s67, %s83
    %p85 = scmp.eq.s32.totalorder %s13, 0
    %p86 = por %p84, %p85
    %p87 = scmp.le.s32.totalorder 1, %s7
    %p88 = scmp.lt.s32.totalorder %s7, 3
    %p89 = pnand %p87, %p88
    %p90 = pneg %p89
    // Predicated region
    $region9: #{crop_forward.1} parent=5 // pred_check
      _
    $region10: #{crop_forward.1} parent=5 // pred_check_branch
      %92 = sbr.rel (%p89) target = $region12
    $region11: #{crop_forward.1} parent=5 // pred_region
      %s93 = ssub.s32 %s7, 1
    $region12: #{crop_forward.1} parent=5 // pred_fallthru
      _
    %p94 = scmp.lt.s32.totalorder %s7, 2
    // Predicated region
    $region13: #{crop_forward.1} parent=5 // pred_check
      %p95 = pneg %p94
    $region14: #{crop_forward.1} parent=5 // pred_check_branch
      %97 = sbr.rel (%p95) target = $region16
    $region15: #{crop_forward.1} parent=5 // pred_region
      // Predicated region
      $region17: #{crop_forward.1} parent=15 // pred_check
        %p98 = pneg %p45
      $region18: #{crop_forward.1} parent=15 // pred_check_branch
        %100 = sbr.rel (%p98) target = $region20
      $region19: #{crop_forward.1} parent=15 // pred_region
        %p101 = scmp.gt.s32.totalorder %s15, 1
        %s102 = scalar_select %p101, %s15, 1
        %s103 = smul.u32 196, %s102
        %p104 = scmp.lt.s32.totalorder %s14, 0
        %s105 = scalar_select %p104, %s14, 0
        %p106 = scmp.lt.s32.totalorder %s103, 391
        %s107 = scalar_select %p106, %s103, 391
        %s108 = smul.addr %s105, 392
        %s109 = sadd.s32 %s107, %s108
        %s110 = smul.addr %s109, 8
        %s111 = scalar_lea.vmem %s0, %s110
        %p112 = scmp.gt.s32.totalorder %s15, 1
        %s113 = scalar_select %p112, %s15, 1
        %s114 = smul.u32 196, %s113
      $region20: #{crop_forward.1} parent=15 // pred_fallthru
        _
    $region16: #{crop_forward.1} parent=5 // pred_fallthru
      _
    %p115 = scmp.le.s32.totalorder 1, %s7
    %p116 = scmp.lt.s32.totalorder %s7, 3
    %p117 = pnand %p115, %p116
    %p118 = pneg %p117
    // Predicated region
    $region21: #{crop_forward.1} parent=5 // pred_check
      _
    $region22: #{crop_forward.1} parent=5 // pred_check_branch
      %120 = sbr.rel (%p117) target = $region24
    $region23: #{crop_forward.1} parent=5 // pred_region
      %s121 = ssub.s32 %s7, 1
      %p122 = scmp.gt.s32.totalorder %s17, 1
      %s123 = scalar_select %p122, %s17, 1
      %s124 = smul.u32 196, %s123
      %p125 = scmp.lt.s32.totalorder %s16, 0
      %s126 = scalar_select %p125, %s16, 0
      %p127 = scmp.lt.s32.totalorder %s124, 391
      %s128 = scalar_select %p127, %s124, 391
      %s129 = smul.addr %s126, 392
      %s130 = sadd.s32 %s128, %s129
      %s131 = smul.addr %s130, 8
      %s132 = scalar_lea.vmem %s0, %s131
      %p133 = pneg %p51
      %p134 = pneg %p48
      %p135 = pneg %p79
      %p136 = pneg %p76
      %s137 = smul.u32 196, %s17
      %p138 = scmp.lt.s32.totalorder %s16, 0
      %s139 = scalar_select %p138, %s16, 0
      %p140 = scmp.lt.s32.totalorder %s137, 391
      %s141 = scalar_select %p140, %s137, 391
      %s142 = smul.addr %s139, 392
      %s143 = sadd.s32 %s141, %s142
      %s144 = smul.addr %s143, 8
      %s145 = scalar_lea.vmem %s1, %s144
      %p146 = scmp.gt.s32.totalorder %s17, 1
      %s147 = scalar_select %p146, %s17, 1
      %s148 = smul.u32 196, %s147
      %p149 = scmp.lt.s32.totalorder %s16, 0
      %s150 = scalar_select %p149, %s16, 0
      %p151 = scmp.lt.s32.totalorder %s148, 391
      %s152 = scalar_select %p151, %s148, 391
      %s153 = smul.addr %s150, 392
      %s154 = sadd.s32 %s152, %s153
      %s155 = smul.addr %s154, 8
      %s156 = scalar_lea.vmem %s0, %s155
      %p157 = scmp.gt.s32.totalorder %s17, 1
      %s158 = scalar_select %p157, %s17, 1
      %s159 = smul.u32 196, %s158
      %s160 = smul.u32 196, %s17
      %p161 = scmp.lt.s32.totalorder %s16, 0
      %s162 = scalar_select %p161, %s16, 0
      %p163 = scmp.lt.s32.totalorder %s160, 391
      %s164 = scalar_select %p163, %s160, 391
      %s165 = smul.addr %s162, 392
      %s166 = sadd.s32 %s164, %s165
      %s167 = smul.addr %s166, 8
      %s168 = scalar_lea.vmem %s1, %s167
      %s169 = smul.u32 196, %s17
      %s170 = smul.u32 %s17, 25088
      %s171 = sadd.s32 %s170, 25088
      %p172 = scmp.le.s32.totalorder %s171, 27776
      // Predicated region
      $region25: #{crop_forward.1} parent=23 // pred_check
        %p173 = pneg %p172
      $region26: #{crop_forward.1} parent=23 // pred_check_branch
        %175 = sbr.rel (%p173) target = $region28
      $region27: #{crop_forward.1} parent=23 // pred_region
        %176 = vst [vmem:[%s168] sm:$0x3f] 0.0
        %177 = vst [vmem:[%s168 + $0x8] sm:$0x3f] 0.0
        %178 = vst [vmem:[%s168 + $0x10] sm:$0x3f] 0.0
        %179 = vst [vmem:[%s168 + $0x18] sm:$0x3f] 0.0
        %180 = vst [vmem:[%s168 + $0x20] sm:$0x3f] 0.0
        %181 = vst [vmem:[%s168 + $0x28] sm:$0x3f] 0.0
        %182 = vst [vmem:[%s168 + $0x30] sm:$0x3f] 0.0
        %183 = vst [vmem:[%s168 + $0x38] sm:$0x3f] 0.0
        %184 = vst [vmem:[%s168 + $0x40] sm:$0x3f] 0.0
        %185 = vst [vmem:[%s168 + $0x48] sm:$0x3f] 0.0
        %186 = vst [vmem:[%s168 + $0x50] sm:$0x3f] 0.0
        %187 = vst [vmem:[%s168 + $0x58] sm:$0x3f] 0.0
        %188 = vst [vmem:[%s168 + $0x60] sm:$0x3f] 0.0
        %189 = vst [vmem:[%s168 + $0x68] sm:$0x3f] 0.0
        %190 = vst [vmem:[%s168 + $0x70] sm:$0x3f] 0.0
        %191 = vst [vmem:[%s168 + $0x78] sm:$0x3f] 0.0
        %192 = vst [vmem:[%s168 + $0x80] sm:$0x3f] 0.0
        %193 = vst [vmem:[%s168 + $0x88] sm:$0x3f] 0.0
        %194 = vst [vmem:[%s168 + $0x90] sm:$0x3f] 0.0
        %195 = vst [vmem:[%s168 + $0x98] sm:$0x3f] 0.0
        %196 = vst [vmem:[%s168 + $0xa0] sm:$0x3f] 0.0
        %197 = vst [vmem:[%s168 + $0xa8] sm:$0x3f] 0.0
        %198 = vst [vmem:[%s168 + $0xb0] sm:$0x3f] 0.0
        %199 = vst [vmem:[%s168 + $0xb8] sm:$0x3f] 0.0
        %200 = vst [vmem:[%s168 + $0xc0] sm:$0x3f] 0.0
        %201 = vst [vmem:[%s168 + $0xc8] sm:$0x3f] 0.0
        %202 = vst [vmem:[%s168 + $0xd0] sm:$0x3f] 0.0
        %203 = vst [vmem:[%s168 + $0xd8] sm:$0x3f] 0.0
        %204 = vst [vmem:[%s168 + $0xe0] sm:$0x3f] 0.0
        %205 = vst [vmem:[%s168 + $0xe8] sm:$0x3f] 0.0
        %206 = vst [vmem:[%s168 + $0xf0] sm:$0x3f] 0.0
        %207 = vst [vmem:[%s168 + $0xf8] sm:$0x3f] 0.0
        %208 = vst [vmem:[%s168 + $0x100] sm:$0x3f] 0.0
        %209 = vst [vmem:[%s168 + $0x108] sm:$0x3f] 0.0
        %210 = vst [vmem:[%s168 + $0x110] sm:$0x3f] 0.0
        %211 = vst [vmem:[%s168 + $0x118] sm:$0x3f] 0.0
        %212 = vst [vmem:[%s168 + $0x120] sm:$0x3f] 0.0
        %213 = vst [vmem:[%s168 + $0x128] sm:$0x3f] 0.0
        %214 = vst [vmem:[%s168 + $0x130] sm:$0x3f] 0.0
        %215 = vst [vmem:[%s168 + $0x138] sm:$0x3f] 0.0
        %216 = vst [vmem:[%s168 + $0x140] sm:$0x3f] 0.0
        %217 = vst [vmem:[%s168 + $0x148] sm:$0x3f] 0.0
        %218 = vst [vmem:[%s168 + $0x150] sm:$0x3f] 0.0
        %219 = vst [vmem:[%s168 + $0x158] sm:$0x3f] 0.0
        %220 = vst [vmem:[%s168 + $0x160] sm:$0x3f] 0.0
        %221 = vst [vmem:[%s168 + $0x168] sm:$0x3f] 0.0
        %222 = vst [vmem:[%s168 + $0x170] sm:$0x3f] 0.0
        %223 = vst [vmem:[%s168 + $0x178] sm:$0x3f] 0.0
        %224 = vst [vmem:[%s168 + $0x180] sm:$0x3f] 0.0
        %225 = vst [vmem:[%s168 + $0x188] sm:$0x3f] 0.0
        %226 = vst [vmem:[%s168 + $0x190] sm:$0x3f] 0.0
        %227 = vst [vmem:[%s168 + $0x198] sm:$0x3f] 0.0
        %228 = vst [vmem:[%s168 + $0x1a0] sm:$0x3f] 0.0
        %229 = vst [vmem:[%s168 + $0x1a8] sm:$0x3f] 0.0
        %230 = vst [vmem:[%s168 + $0x1b0] sm:$0x3f] 0.0
        %231 = vst [vmem:[%s168 + $0x1b8] sm:$0x3f] 0.0
        %232 = vst [vmem:[%s168 + $0x1c0] sm:$0x3f] 0.0
        %233 = vst [vmem:[%s168 + $0x1c8] sm:$0x3f] 0.0
        %234 = vst [vmem:[%s168 + $0x1d0] sm:$0x3f] 0.0
        %235 = vst [vmem:[%s168 + $0x1d8] sm:$0x3f] 0.0
        %236 = vst [vmem:[%s168 + $0x1e0] sm:$0x3f] 0.0
        %237 = vst [vmem:[%s168 + $0x1e8] sm:$0x3f] 0.0
        %238 = vst [vmem:[%s168 + $0x1f0] sm:$0x3f] 0.0
        %239 = vst [vmem:[%s168 + $0x1f8] sm:$0x3f] 0.0
        %240 = vst [vmem:[%s168 + $0x200] sm:$0x3f] 0.0
        %241 = vst [vmem:[%s168 + $0x208] sm:$0x3f] 0.0
        %242 = vst [vmem:[%s168 + $0x210] sm:$0x3f] 0.0
        %243 = vst [vmem:[%s168 + $0x218] sm:$0x3f] 0.0
        %244 = vst [vmem:[%s168 + $0x220] sm:$0x3f] 0.0
        %245 = vst [vmem:[%s168 + $0x228] sm:$0x3f] 0.0
        %246 = vst [vmem:[%s168 + $0x230] sm:$0x3f] 0.0
        %247 = vst [vmem:[%s168 + $0x238] sm:$0x3f] 0.0
        %248 = vst [vmem:[%s168 + $0x240] sm:$0x3f] 0.0
        %249 = vst [vmem:[%s168 + $0x248] sm:$0x3f] 0.0
        %250 = vst [vmem:[%s168 + $0x250] sm:$0x3f] 0.0
        %251 = vst [vmem:[%s168 + $0x258] sm:$0x3f] 0.0
        %252 = vst [vmem:[%s168 + $0x260] sm:$0x3f] 0.0
        %253 = vst [vmem:[%s168 + $0x268] sm:$0x3f] 0.0
        %254 = vst [vmem:[%s168 + $0x270] sm:$0x3f] 0.0
        %255 = vst [vmem:[%s168 + $0x278] sm:$0x3f] 0.0
        %256 = vst [vmem:[%s168 + $0x280] sm:$0x3f] 0.0
        %257 = vst [vmem:[%s168 + $0x288] sm:$0x3f] 0.0
        %258 = vst [vmem:[%s168 + $0x290] sm:$0x3f] 0.0
        %259 = vst [vmem:[%s168 + $0x298] sm:$0x3f] 0.0
        %260 = vst [vmem:[%s168 + $0x2a0] sm:$0x3f] 0.0
        %261 = vst [vmem:[%s168 + $0x2a8] sm:$0x3f] 0.0
        %262 = vst [vmem:[%s168 + $0x2b0] sm:$0x3f] 0.0
        %263 = vst [vmem:[%s168 + $0x2b8] sm:$0x3f] 0.0
        %264 = vst [vmem:[%s168 + $0x2c0] sm:$0x3f] 0.0
        %265 = vst [vmem:[%s168 + $0x2c8] sm:$0x3f] 0.0
        %266 = vst [vmem:[%s168 + $0x2d0] sm:$0x3f] 0.0
        %267 = vst [vmem:[%s168 + $0x2d8] sm:$0x3f] 0.0
        %268 = vst [vmem:[%s168 + $0x2e0] sm:$0x3f] 0.0
        %269 = vst [vmem:[%s168 + $0x2e8] sm:$0x3f] 0.0
        %270 = vst [vmem:[%s168 + $0x2f0] sm:$0x3f] 0.0
        %271 = vst [vmem:[%s168 + $0x2f8] sm:$0x3f] 0.0
        %272 = vst [vmem:[%s168 + $0x300] sm:$0x3f] 0.0
        %273 = vst [vmem:[%s168 + $0x308] sm:$0x3f] 0.0
        %274 = vst [vmem:[%s168 + $0x310] sm:$0x3f] 0.0
        %275 = vst [vmem:[%s168 + $0x318] sm:$0x3f] 0.0
        %276 = vst [vmem:[%s168 + $0x320] sm:$0x3f] 0.0
        %277 = vst [vmem:[%s168 + $0x328] sm:$0x3f] 0.0
        %278 = vst [vmem:[%s168 + $0x330] sm:$0x3f] 0.0
        %279 = vst [vmem:[%s168 + $0x338] sm:$0x3f] 0.0
        %280 = vst [vmem:[%s168 + $0x340] sm:$0x3f] 0.0
        %281 = vst [vmem:[%s168 + $0x348] sm:$0x3f] 0.0
        %282 = vst [vmem:[%s168 + $0x350] sm:$0x3f] 0.0
        %283 = vst [vmem:[%s168 + $0x358] sm:$0x3f] 0.0
        %284 = vst [vmem:[%s168 + $0x360] sm:$0x3f] 0.0
        %285 = vst [vmem:[%s168 + $0x368] sm:$0x3f] 0.0
        %286 = vst [vmem:[%s168 + $0x370] sm:$0x3f] 0.0
        %287 = vst [vmem:[%s168 + $0x378] sm:$0x3f] 0.0
        %288 = vst [vmem:[%s168 + $0x380] sm:$0x3f] 0.0
        %289 = vst [vmem:[%s168 + $0x388] sm:$0x3f] 0.0
        %290 = vst [vmem:[%s168 + $0x390] sm:$0x3f] 0.0
        %291 = vst [vmem:[%s168 + $0x398] sm:$0x3f] 0.0
        %292 = vst [vmem:[%s168 + $0x3a0] sm:$0x3f] 0.0
        %293 = vst [vmem:[%s168 + $0x3a8] sm:$0x3f] 0.0
        %294 = vst [vmem:[%s168 + $0x3b0] sm:$0x3f] 0.0
        %295 = vst [vmem:[%s168 + $0x3b8] sm:$0x3f] 0.0
        %296 = vst [vmem:[%s168 + $0x3c0] sm:$0x3f] 0.0
        %297 = vst [vmem:[%s168 + $0x3c8] sm:$0x3f] 0.0
        %298 = vst [vmem:[%s168 + $0x3d0] sm:$0x3f] 0.0
        %299 = vst [vmem:[%s168 + $0x3d8] sm:$0x3f] 0.0
        %300 = vst [vmem:[%s168 + $0x3e0] sm:$0x3f] 0.0
        %301 = vst [vmem:[%s168 + $0x3e8] sm:$0x3f] 0.0
        %302 = vst [vmem:[%s168 + $0x3f0] sm:$0x3f] 0.0
        %303 = vst [vmem:[%s168 + $0x3f8] sm:$0x3f] 0.0
        %304 = vst [vmem:[%s168 + $0x400] sm:$0x3f] 0.0
        %305 = vst [vmem:[%s168 + $0x408] sm:$0x3f] 0.0
        %306 = vst [vmem:[%s168 + $0x410] sm:$0x3f] 0.0
        %307 = vst [vmem:[%s168 + $0x418] sm:$0x3f] 0.0
        %308 = vst [vmem:[%s168 + $0x420] sm:$0x3f] 0.0
        %309 = vst [vmem:[%s168 + $0x428] sm:$0x3f] 0.0
        %310 = vst [vmem:[%s168 + $0x430] sm:$0x3f] 0.0
        %311 = vst [vmem:[%s168 + $0x438] sm:$0x3f] 0.0
        %312 = vst [vmem:[%s168 + $0x440] sm:$0x3f] 0.0
        %313 = vst [vmem:[%s168 + $0x448] sm:$0x3f] 0.0
        %314 = vst [vmem:[%s168 + $0x450] sm:$0x3f] 0.0
        %315 = vst [vmem:[%s168 + $0x458] sm:$0x3f] 0.0
        %316 = vst [vmem:[%s168 + $0x460] sm:$0x3f] 0.0
        %317 = vst [vmem:[%s168 + $0x468] sm:$0x3f] 0.0
        %318 = vst [vmem:[%s168 + $0x470] sm:$0x3f] 0.0
        %319 = vst [vmem:[%s168 + $0x478] sm:$0x3f] 0.0
        %320 = vst [vmem:[%s168 + $0x480] sm:$0x3f] 0.0
        %321 = vst [vmem:[%s168 + $0x488] sm:$0x3f] 0.0
        %322 = vst [vmem:[%s168 + $0x490] sm:$0x3f] 0.0
        %323 = vst [vmem:[%s168 + $0x498] sm:$0x3f] 0.0
        %324 = vst [vmem:[%s168 + $0x4a0] sm:$0x3f] 0.0
        %325 = vst [vmem:[%s168 + $0x4a8] sm:$0x3f] 0.0
        %326 = vst [vmem:[%s168 + $0x4b0] sm:$0x3f] 0.0
        %327 = vst [vmem:[%s168 + $0x4b8] sm:$0x3f] 0.0
        %328 = vst [vmem:[%s168 + $0x4c0] sm:$0x3f] 0.0
        %329 = vst [vmem:[%s168 + $0x4c8] sm:$0x3f] 0.0
        %330 = vst [vmem:[%s168 + $0x4d0] sm:$0x3f] 0.0
        %331 = vst [vmem:[%s168 + $0x4d8] sm:$0x3f] 0.0
        %332 = vst [vmem:[%s168 + $0x4e0] sm:$0x3f] 0.0
        %333 = vst [vmem:[%s168 + $0x4e8] sm:$0x3f] 0.0
        %334 = vst [vmem:[%s168 + $0x4f0] sm:$0x3f] 0.0
        %335 = vst [vmem:[%s168 + $0x4f8] sm:$0x3f] 0.0
        %336 = vst [vmem:[%s168 + $0x500] sm:$0x3f] 0.0
        %337 = vst [vmem:[%s168 + $0x508] sm:$0x3f] 0.0
        %338 = vst [vmem:[%s168 + $0x510] sm:$0x3f] 0.0
        %339 = vst [vmem:[%s168 + $0x518] sm:$0x3f] 0.0
        %340 = vst [vmem:[%s168 + $0x520] sm:$0x3f] 0.0
        %341 = vst [vmem:[%s168 + $0x528] sm:$0x3f] 0.0
        %342 = vst [vmem:[%s168 + $0x530] sm:$0x3f] 0.0
        %343 = vst [vmem:[%s168 + $0x538] sm:$0x3f] 0.0
        %344 = vst [vmem:[%s168 + $0x540] sm:$0x3f] 0.0
        %345 = vst [vmem:[%s168 + $0x548] sm:$0x3f] 0.0
        %346 = vst [vmem:[%s168 + $0x550] sm:$0x3f] 0.0
        %347 = vst [vmem:[%s168 + $0x558] sm:$0x3f] 0.0
        %348 = vst [vmem:[%s168 + $0x560] sm:$0x3f] 0.0
        %349 = vst [vmem:[%s168 + $0x568] sm:$0x3f] 0.0
        %350 = vst [vmem:[%s168 + $0x570] sm:$0x3f] 0.0
        %351 = vst [vmem:[%s168 + $0x578] sm:$0x3f] 0.0
        %352 = vst [vmem:[%s168 + $0x580] sm:$0x3f] 0.0
        %353 = vst [vmem:[%s168 + $0x588] sm:$0x3f] 0.0
        %354 = vst [vmem:[%s168 + $0x590] sm:$0x3f] 0.0
        %355 = vst [vmem:[%s168 + $0x598] sm:$0x3f] 0.0
        %356 = vst [vmem:[%s168 + $0x5a0] sm:$0x3f] 0.0
        %357 = vst [vmem:[%s168 + $0x5a8] sm:$0x3f] 0.0
        %358 = vst [vmem:[%s168 + $0x5b0] sm:$0x3f] 0.0
        %359 = vst [vmem:[%s168 + $0x5b8] sm:$0x3f] 0.0
        %360 = vst [vmem:[%s168 + $0x5c0] sm:$0x3f] 0.0
        %361 = vst [vmem:[%s168 + $0x5c8] sm:$0x3f] 0.0
        %362 = vst [vmem:[%s168 + $0x5d0] sm:$0x3f] 0.0
        %363 = vst [vmem:[%s168 + $0x5d8] sm:$0x3f] 0.0
        %364 = vst [vmem:[%s168 + $0x5e0] sm:$0x3f] 0.0
        %365 = vst [vmem:[%s168 + $0x5e8] sm:$0x3f] 0.0
        %366 = vst [vmem:[%s168 + $0x5f0] sm:$0x3f] 0.0
        %367 = vst [vmem:[%s168 + $0x5f8] sm:$0x3f] 0.0
        %368 = vst [vmem:[%s168 + $0x600] sm:$0x3f] 0.0
        %369 = vst [vmem:[%s168 + $0x608] sm:$0x3f] 0.0
        %370 = vst [vmem:[%s168 + $0x610] sm:$0x3f] 0.0
        %371 = vst [vmem:[%s168 + $0x618] sm:$0x3f] 0.0
      $region28: #{crop_forward.1} parent=23 // pred_fallthru
        _
      %p372 = scmp.gt.s32.totalorder %s171, 27776
      // Predicated region
      $region29: #{crop_forward.1} parent=23 // pred_check
        %p373 = pneg %p372
      $region30: #{crop_forward.1} parent=23 // pred_check_branch
        %375 = sbr.rel (%p373) target = $region32
      $region31: #{crop_forward.1} parent=23 // pred_region
        %v376 = vld [vmem:[%s156] sm:$0x3f]
        %v377 = vld [vmem:[%s156 + $0x8] sm:$0x3f]
        %v378 = vld [vmem:[%s156 + $0x10] sm:$0x3f]
        %v379 = vld [vmem:[%s156 + $0x18] sm:$0x3f]
        %v380 = vld [vmem:[%s156 + $0x20] sm:$0x3f]
        %v381 = vld [vmem:[%s156 + $0x28] sm:$0x3f]
        %v382 = vld [vmem:[%s156 + $0x30] sm:$0x3f]
        %v383 = vld [vmem:[%s156 + $0x38] sm:$0x3f]
        %v384 = vld [vmem:[%s156 + $0x40] sm:$0x3f]
        %v385 = vld [vmem:[%s156 + $0x48] sm:$0x3f]
        %v386 = vld [vmem:[%s156 + $0x50] sm:$0x3f]
        %v387 = vld [vmem:[%s156 + $0x58] sm:$0x3f]
        %v388 = vld [vmem:[%s156 + $0x60] sm:$0x3f]
        %v389 = vld [vmem:[%s156 + $0x68] sm:$0x3f]
        %v390 = vld [vmem:[%s156 + $0x70] sm:$0x3f]
        %v391 = vld [vmem:[%s156 + $0x78] sm:$0x3f]
        %v392 = vld [vmem:[%s156 + $0x80] sm:$0x3f]
        %v393 = vld [vmem:[%s156 + $0x88] sm:$0x3f]
        %v394 = vld [vmem:[%s156 + $0x90] sm:$0x3f]
        %v395 = vld [vmem:[%s156 + $0x98] sm:$0x3f]
        %v396 = vld [vmem:[%s156 + $0xa0] sm:$0x3f]
        %v397 = vld [vmem:[%s156 + $0xa8] sm:$0x3f]
        %v398 = vld [vmem:[%s156 + $0xb0] sm:$0x3f]
        %v399 = vld [vmem:[%s156 + $0xb8] sm:$0x3f]
        %v400 = vld [vmem:[%s156 + $0xc0] sm:$0x3f]
        %v401 = vld [vmem:[%s156 + $0xc8] sm:$0x3f]
        %v402 = vld [vmem:[%s156 + $0xd0] sm:$0x3f]
        %v403 = vld [vmem:[%s156 + $0xd8] sm:$0x3f]
        %v404 = vld [vmem:[%s156 + $0xe0] sm:$0x3f]
        %v405 = vld [vmem:[%s156 + $0xe8] sm:$0x3f]
        %v406 = vld [vmem:[%s156 + $0xf0] sm:$0x3f]
        %v407 = vld [vmem:[%s156 + $0xf8] sm:$0x3f]
        %v408 = vld [vmem:[%s156 + $0x100] sm:$0x3f]
        %v409 = vld [vmem:[%s156 + $0x108] sm:$0x3f]
        %v410 = vld [vmem:[%s156 + $0x110] sm:$0x3f]
        %v411 = vld [vmem:[%s156 + $0x118] sm:$0x3f]
        %v412 = vld [vmem:[%s156 + $0x120] sm:$0x3f]
        %v413 = vld [vmem:[%s156 + $0x128] sm:$0x3f]
        %v414 = vld [vmem:[%s156 + $0x130] sm:$0x3f]
        %v415 = vld [vmem:[%s156 + $0x138] sm:$0x3f]
        %v416 = vld [vmem:[%s156 + $0x140] sm:$0x3f]
        %v417 = vld [vmem:[%s156 + $0x148] sm:$0x3f]
        %v418 = vld [vmem:[%s156 + $0x150] sm:$0x3f]
        %v419 = vld [vmem:[%s156 + $0x158] sm:$0x3f]
        %v420 = vld [vmem:[%s156 + $0x160] sm:$0x3f]
        %v421 = vld [vmem:[%s156 + $0x168] sm:$0x3f]
        %v422 = vld [vmem:[%s156 + $0x170] sm:$0x3f]
        %v423 = vld [vmem:[%s156 + $0x178] sm:$0x3f]
        %v424 = vld [vmem:[%s156 + $0x180] sm:$0x3f]
        %v425 = vld [vmem:[%s156 + $0x188] sm:$0x3f]
        %v426 = vld [vmem:[%s156 + $0x190] sm:$0x3f]
        %v427 = vld [vmem:[%s156 + $0x198] sm:$0x3f]
        %v428 = vld [vmem:[%s156 + $0x1a0] sm:$0x3f]
        %v429 = vld [vmem:[%s156 + $0x1a8] sm:$0x3f]
        %v430 = vld [vmem:[%s156 + $0x1b0] sm:$0x3f]
        %v431 = vld [vmem:[%s156 + $0x1b8] sm:$0x3f]
        %v432 = vld [vmem:[%s156 + $0x1c0] sm:$0x3f]
        %v433 = vld [vmem:[%s156 + $0x1c8] sm:$0x3f]
        %v434 = vld [vmem:[%s156 + $0x1d0] sm:$0x3f]
        %v435 = vld [vmem:[%s156 + $0x1d8] sm:$0x3f]
        %v436 = vld [vmem:[%s156 + $0x1e0] sm:$0x3f]
        %v437 = vld [vmem:[%s156 + $0x1e8] sm:$0x3f]
        %v438 = vld [vmem:[%s156 + $0x1f0] sm:$0x3f]
        %v439 = vld [vmem:[%s156 + $0x1f8] sm:$0x3f]
        %v440 = vld [vmem:[%s156 + $0x200] sm:$0x3f]
        %v441 = vld [vmem:[%s156 + $0x208] sm:$0x3f]
        %v442 = vld [vmem:[%s156 + $0x210] sm:$0x3f]
        %v443 = vld [vmem:[%s156 + $0x218] sm:$0x3f]
        %v444 = vld [vmem:[%s156 + $0x220] sm:$0x3f]
        %v445 = vld [vmem:[%s156 + $0x228] sm:$0x3f]
        %v446 = vld [vmem:[%s156 + $0x230] sm:$0x3f]
        %v447 = vld [vmem:[%s156 + $0x238] sm:$0x3f]
        %v448 = vld [vmem:[%s156 + $0x240] sm:$0x3f]
        %v449 = vld [vmem:[%s156 + $0x248] sm:$0x3f]
        %v450 = vld [vmem:[%s156 + $0x250] sm:$0x3f]
        %v451 = vld [vmem:[%s156 + $0x258] sm:$0x3f]
        %v452 = vld [vmem:[%s156 + $0x260] sm:$0x3f]
        %v453 = vld [vmem:[%s156 + $0x268] sm:$0x3f]
        %v454 = vld [vmem:[%s156 + $0x270] sm:$0x3f]
        %v455 = vld [vmem:[%s156 + $0x278] sm:$0x3f]
        %v456 = vld [vmem:[%s156 + $0x280] sm:$0x3f]
        %v457 = vld [vmem:[%s156 + $0x288] sm:$0x3f]
        %v458 = vld [vmem:[%s156 + $0x290] sm:$0x3f]
        %v459 = vld [vmem:[%s156 + $0x298] sm:$0x3f]
        %v460 = vld [vmem:[%s156 + $0x2a0] sm:$0x3f]
        %v461 = vld [vmem:[%s156 + $0x2a8] sm:$0x3f]
        %v462 = vld [vmem:[%s156 + $0x2b0] sm:$0x3f]
        %v463 = vld [vmem:[%s156 + $0x2b8] sm:$0x3f]
        %v464 = vld [vmem:[%s156 + $0x2c0] sm:$0x3f]
        %v465 = vld [vmem:[%s156 + $0x2c8] sm:$0x3f]
        %v466 = vld [vmem:[%s156 + $0x2d0] sm:$0x3f]
        %v467 = vld [vmem:[%s156 + $0x2d8] sm:$0x3f]
        %v468 = vld [vmem:[%s156 + $0x2e0] sm:$0x3f]
        %v469 = vld [vmem:[%s156 + $0x2e8] sm:$0x3f]
        %v470 = vld [vmem:[%s156 + $0x2f0] sm:$0x3f]
        %v471 = vld [vmem:[%s156 + $0x2f8] sm:$0x3f]
        %v472 = vld [vmem:[%s156 + $0x300] sm:$0x3f]
        %v473 = vld [vmem:[%s156 + $0x308] sm:$0x3f]
        %v474 = vld [vmem:[%s156 + $0x310] sm:$0x3f]
        %v475 = vld [vmem:[%s156 + $0x318] sm:$0x3f]
        %v476 = vld [vmem:[%s156 + $0x320] sm:$0x3f]
        %v477 = vld [vmem:[%s156 + $0x328] sm:$0x3f]
        %v478 = vld [vmem:[%s156 + $0x330] sm:$0x3f]
        %v479 = vld [vmem:[%s156 + $0x338] sm:$0x3f]
        %v480 = vld [vmem:[%s156 + $0x340] sm:$0x3f]
        %v481 = vld [vmem:[%s156 + $0x348] sm:$0x3f]
        %v482 = vld [vmem:[%s156 + $0x350] sm:$0x3f]
        %v483 = vld [vmem:[%s156 + $0x358] sm:$0x3f]
        %v484 = vld [vmem:[%s156 + $0x360] sm:$0x3f]
        %v485 = vld [vmem:[%s156 + $0x368] sm:$0x3f]
        %v486 = vld [vmem:[%s156 + $0x370] sm:$0x3f]
        %v487 = vld [vmem:[%s156 + $0x378] sm:$0x3f]
        %v488 = vld [vmem:[%s156 + $0x380] sm:$0x3f]
        %v489 = vld [vmem:[%s156 + $0x388] sm:$0x3f]
        %v490 = vld [vmem:[%s156 + $0x390] sm:$0x3f]
        %v491 = vld [vmem:[%s156 + $0x398] sm:$0x3f]
        %v492 = vld [vmem:[%s156 + $0x3a0] sm:$0x3f]
        %v493 = vld [vmem:[%s156 + $0x3a8] sm:$0x3f]
        %v494 = vld [vmem:[%s156 + $0x3b0] sm:$0x3f]
        %v495 = vld [vmem:[%s156 + $0x3b8] sm:$0x3f]
        %v496 = vld [vmem:[%s156 + $0x3c0] sm:$0x3f]
        %v497 = vld [vmem:[%s156 + $0x3c8] sm:$0x3f]
        %v498 = vld [vmem:[%s156 + $0x3d0] sm:$0x3f]
        %v499 = vld [vmem:[%s156 + $0x3d8] sm:$0x3f]
        %v500 = vld [vmem:[%s156 + $0x3e0] sm:$0x3f]
        %v501 = vld [vmem:[%s156 + $0x3e8] sm:$0x3f]
        %v502 = vld [vmem:[%s156 + $0x3f0] sm:$0x3f]
        %v503 = vld [vmem:[%s156 + $0x3f8] sm:$0x3f]
        %v504 = vld [vmem:[%s156 + $0x400] sm:$0x3f]
        %v505 = vld [vmem:[%s156 + $0x408] sm:$0x3f]
        %v506 = vld [vmem:[%s156 + $0x410] sm:$0x3f]
        %v507 = vld [vmem:[%s156 + $0x418] sm:$0x3f]
        %v508 = vld [vmem:[%s156 + $0x420] sm:$0x3f]
        %v509 = vld [vmem:[%s156 + $0x428] sm:$0x3f]
        %v510 = vld [vmem:[%s156 + $0x430] sm:$0x3f]
        %v511 = vld [vmem:[%s156 + $0x438] sm:$0x3f]
        %v512 = vld [vmem:[%s156 + $0x440] sm:$0x3f]
        %v513 = vld [vmem:[%s156 + $0x448] sm:$0x3f]
        %v514 = vld [vmem:[%s156 + $0x450] sm:$0x3f]
        %v515 = vld [vmem:[%s156 + $0x458] sm:$0x3f]
        %v516 = vld [vmem:[%s156 + $0x460] sm:$0x3f]
        %v517 = vld [vmem:[%s156 + $0x468] sm:$0x3f]
        %v518 = vld [vmem:[%s156 + $0x470] sm:$0x3f]
        %v519 = vld [vmem:[%s156 + $0x478] sm:$0x3f]
        %v520 = vld [vmem:[%s156 + $0x480] sm:$0x3f]
        %v521 = vld [vmem:[%s156 + $0x488] sm:$0x3f]
        %v522 = vld [vmem:[%s156 + $0x490] sm:$0x3f]
        %v523 = vld [vmem:[%s156 + $0x498] sm:$0x3f]
        %v524 = vld [vmem:[%s156 + $0x4a0] sm:$0x3f]
        %v525 = vld [vmem:[%s156 + $0x4a8] sm:$0x3f]
        %v526 = vld [vmem:[%s156 + $0x4b0] sm:$0x3f]
        %v527 = vld [vmem:[%s156 + $0x4b8] sm:$0x3f]
        %v528 = vld [vmem:[%s156 + $0x4c0] sm:$0x3f]
        %v529 = vld [vmem:[%s156 + $0x4c8] sm:$0x3f]
        %v530 = vld [vmem:[%s156 + $0x4d0] sm:$0x3f]
        %v531 = vld [vmem:[%s156 + $0x4d8] sm:$0x3f]
        %v532 = vld [vmem:[%s156 + $0x4e0] sm:$0x3f]
        %v533 = vld [vmem:[%s156 + $0x4e8] sm:$0x3f]
        %v534 = vld [vmem:[%s156 + $0x4f0] sm:$0x3f]
        %v535 = vld [vmem:[%s156 + $0x4f8] sm:$0x3f]
        %v536 = vld [vmem:[%s156 + $0x500] sm:$0x3f]
        %v537 = vld [vmem:[%s156 + $0x508] sm:$0x3f]
        %v538 = vld [vmem:[%s156 + $0x510] sm:$0x3f]
        %v539 = vld [vmem:[%s156 + $0x518] sm:$0x3f]
        %v540 = vld [vmem:[%s156 + $0x520] sm:$0x3f]
        %v541 = vld [vmem:[%s156 + $0x528] sm:$0x3f]
        %v542 = vld [vmem:[%s156 + $0x530] sm:$0x3f]
        %v543 = vld [vmem:[%s156 + $0x538] sm:$0x3f]
        %v544 = vld [vmem:[%s156 + $0x540] sm:$0x3f]
        %v545 = vld [vmem:[%s156 + $0x548] sm:$0x3f]
        %v546 = vld [vmem:[%s156 + $0x550] sm:$0x3f]
        %v547 = vld [vmem:[%s156 + $0x558] sm:$0x3f]
        %v548 = vld [vmem:[%s156 + $0x560] sm:$0x3f]
        %v549 = vld [vmem:[%s156 + $0x568] sm:$0x3f]
        %v550 = vld [vmem:[%s156 + $0x570] sm:$0x3f]
        %v551 = vld [vmem:[%s156 + $0x578] sm:$0x3f]
        %v552 = vld [vmem:[%s156 + $0x580] sm:$0x3f]
        %v553 = vld [vmem:[%s156 + $0x588] sm:$0x3f]
        %v554 = vld [vmem:[%s156 + $0x590] sm:$0x3f]
        %v555 = vld [vmem:[%s156 + $0x598] sm:$0x3f]
        %v556 = vld [vmem:[%s156 + $0x5a0] sm:$0x3f]
        %v557 = vld [vmem:[%s156 + $0x5a8] sm:$0x3f]
        %v558 = vld [vmem:[%s156 + $0x5b0] sm:$0x3f]
        %v559 = vld [vmem:[%s156 + $0x5b8] sm:$0x3f]
        %v560 = vld [vmem:[%s156 + $0x5c0] sm:$0x3f]
        %v561 = vld [vmem:[%s156 + $0x5c8] sm:$0x3f]
        %v562 = vld [vmem:[%s156 + $0x5d0] sm:$0x3f]
        %v563 = vld [vmem:[%s156 + $0x5d8] sm:$0x3f]
        %v564 = vld [vmem:[%s156 + $0x5e0] sm:$0x3f]
        %v565 = vld [vmem:[%s156 + $0x5e8] sm:$0x3f]
        %v566 = vld [vmem:[%s156 + $0x5f0] sm:$0x3f]
        %v567 = vld [vmem:[%s156 + $0x5f8] sm:$0x3f]
        %v568 = vld [vmem:[%s156 + $0x600] sm:$0x3f]
        %v569 = vld [vmem:[%s156 + $0x608] sm:$0x3f]
        %v570 = vld [vmem:[%s156 + $0x610] sm:$0x3f]
        %v571 = vld [vmem:[%s156 + $0x618] sm:$0x3f]
        %v572 = vlaneseq
        %v573 = vand.u32 %v572, 127
        %v574 = vadd.s32 %v573, 128
        %v575 = vadd.s32 %v573, 256
        %v576 = vadd.s32 %v573, 384
        %v577 = vadd.s32 %v573, 512
        %v578 = vadd.s32 %v573, 640
        %v579 = vadd.s32 %v573, 768
        %v580 = vadd.s32 %v573, 896
        %v581 = vadd.s32 %v573, 1024
        %v582 = vadd.s32 %v573, 1152
        %v583 = vadd.s32 %v573, 1280
        %v584 = vadd.s32 %v573, 1408
        %v585 = vadd.s32 %v573, 1536
        %v586 = vadd.s32 %v573, 1664
        %v587 = vadd.s32 %v573, 1792
        %v588 = vadd.s32 %v573, 1920
        %v589 = vadd.s32 %v573, 2048
        %v590 = vadd.s32 %v573, 2176
        %v591 = vadd.s32 %v573, 2304
        %v592 = vadd.s32 %v573, 2432
        %v593 = vadd.s32 %v573, 2560
        %v594 = vadd.s32 %v573, 2688
        %v595 = vadd.s32 %v573, 2816
        %v596 = vadd.s32 %v573, 2944
        %v597 = vadd.s32 %v573, 3072
        %v598 = vadd.s32 %v573, 3200
        %v599 = vadd.s32 %v573, 3328
        %v600 = vadd.s32 %v573, 3456
        %v601 = vadd.s32 %v573, 3584
        %v602 = vadd.s32 %v573, 3712
        %v603 = vadd.s32 %v573, 3840
        %v604 = vadd.s32 %v573, 3968
        %v605 = vadd.s32 %v573, 4096
        %v606 = vadd.s32 %v573, 4224
        %v607 = vadd.s32 %v573, 4352
        %v608 = vadd.s32 %v573, 4480
        %v609 = vadd.s32 %v573, 4608
        %v610 = vadd.s32 %v573, 4736
        %v611 = vadd.s32 %v573, 4864
        %v612 = vadd.s32 %v573, 4992
        %v613 = vadd.s32 %v573, 5120
        %v614 = vadd.s32 %v573, 5248
        %v615 = vadd.s32 %v573, 5376
        %v616 = vadd.s32 %v573, 5504
        %v617 = vadd.s32 %v573, 5632
        %v618 = vadd.s32 %v573, 5760
        %v619 = vadd.s32 %v573, 5888
        %v620 = vadd.s32 %v573, 6016
        %v621 = vadd.s32 %v573, 6144
        %v622 = vadd.s32 %v573, 6272
        %v623 = vadd.s32 %v573, 6400
        %v624 = vadd.s32 %v573, 6528
        %v625 = vadd.s32 %v573, 6656
        %v626 = vadd.s32 %v573, 6784
        %v627 = vadd.s32 %v573, 6912
        %v628 = vadd.s32 %v573, 7040
        %v629 = vadd.s32 %v573, 7168
        %v630 = vadd.s32 %v573, 7296
        %v631 = vadd.s32 %v573, 7424
        %v632 = vadd.s32 %v573, 7552
        %v633 = vadd.s32 %v573, 7680
        %v634 = vadd.s32 %v573, 7808
        %v635 = vadd.s32 %v573, 7936
        %v636 = vadd.s32 %v573, 8064
        %v637 = vadd.s32 %v573, 8192
        %v638 = vadd.s32 %v573, 8320
        %v639 = vadd.s32 %v573, 8448
        %v640 = vadd.s32 %v573, 8576
        %v641 = vadd.s32 %v573, 8704
        %v642 = vadd.s32 %v573, 8832
        %v643 = vadd.s32 %v573, 8960
        %v644 = vadd.s32 %v573, 9088
        %v645 = vadd.s32 %v573, 9216
        %v646 = vadd.s32 %v573, 9344
        %v647 = vadd.s32 %v573, 9472
        %v648 = vadd.s32 %v573, 9600
        %v649 = vadd.s32 %v573, 9728
        %v650 = vadd.s32 %v573, 9856
        %v651 = vadd.s32 %v573, 9984
        %v652 = vadd.s32 %v573, 10112
        %v653 = vadd.s32 %v573, 10240
        %v654 = vadd.s32 %v573, 10368
        %v655 = vadd.s32 %v573, 10496
        %v656 = vadd.s32 %v573, 10624
        %v657 = vadd.s32 %v573, 10752
        %v658 = vadd.s32 %v573, 10880
        %v659 = vadd.s32 %v573, 11008
        %v660 = vadd.s32 %v573, 11136
        %v661 = vadd.s32 %v573, 11264
        %v662 = vadd.s32 %v573, 11392
        %v663 = vadd.s32 %v573, 11520
        %v664 = vadd.s32 %v573, 11648
        %v665 = vadd.s32 %v573, 11776
        %v666 = vadd.s32 %v573, 11904
        %v667 = vadd.s32 %v573, 12032
        %v668 = vadd.s32 %v573, 12160
        %v669 = vadd.s32 %v573, 12288
        %v670 = vadd.s32 %v573, 12416
        %v671 = vadd.s32 %v573, 12544
        %v672 = vadd.s32 %v573, 12672
        %v673 = vadd.s32 %v573, 12800
        %v674 = vadd.s32 %v573, 12928
        %v675 = vadd.s32 %v573, 13056
        %v676 = vadd.s32 %v573, 13184
        %v677 = vadd.s32 %v573, 13312
        %v678 = vadd.s32 %v573, 13440
        %v679 = vadd.s32 %v573, 13568
        %v680 = vadd.s32 %v573, 13696
        %v681 = vadd.s32 %v573, 13824
        %v682 = vadd.s32 %v573, 13952
        %v683 = vadd.s32 %v573, 14080
        %v684 = vadd.s32 %v573, 14208
        %v685 = vadd.s32 %v573, 14336
        %v686 = vadd.s32 %v573, 14464
        %v687 = vadd.s32 %v573, 14592
        %v688 = vadd.s32 %v573, 14720
        %v689 = vadd.s32 %v573, 14848
        %v690 = vadd.s32 %v573, 14976
        %v691 = vadd.s32 %v573, 15104
        %v692 = vadd.s32 %v573, 15232
        %v693 = vadd.s32 %v573, 15360
        %v694 = vadd.s32 %v573, 15488
        %v695 = vadd.s32 %v573, 15616
        %v696 = vadd.s32 %v573, 15744
        %v697 = vadd.s32 %v573, 15872
        %v698 = vadd.s32 %v573, 16000
        %v699 = vadd.s32 %v573, 16128
        %v700 = vadd.s32 %v573, 16256
        %v701 = vadd.s32 %v573, 16384
        %v702 = vadd.s32 %v573, 16512
        %v703 = vadd.s32 %v573, 16640
        %v704 = vadd.s32 %v573, 16768
        %v705 = vadd.s32 %v573, 16896
        %v706 = vadd.s32 %v573, 17024
        %v707 = vadd.s32 %v573, 17152
        %v708 = vadd.s32 %v573, 17280
        %v709 = vadd.s32 %v573, 17408
        %v710 = vadd.s32 %v573, 17536
        %v711 = vadd.s32 %v573, 17664
        %v712 = vadd.s32 %v573, 17792
        %v713 = vadd.s32 %v573, 17920
        %v714 = vadd.s32 %v573, 18048
        %v715 = vadd.s32 %v573, 18176
        %v716 = vadd.s32 %v573, 18304
        %v717 = vadd.s32 %v573, 18432
        %v718 = vadd.s32 %v573, 18560
        %v719 = vadd.s32 %v573, 18688
        %v720 = vadd.s32 %v573, 18816
        %v721 = vadd.s32 %v573, 18944
        %v722 = vadd.s32 %v573, 19072
        %v723 = vadd.s32 %v573, 19200
        %v724 = vadd.s32 %v573, 19328
        %v725 = vadd.s32 %v573, 19456
        %v726 = vadd.s32 %v573, 19584
        %v727 = vadd.s32 %v573, 19712
        %v728 = vadd.s32 %v573, 19840
        %v729 = vadd.s32 %v573, 19968
        %v730 = vadd.s32 %v573, 20096
        %v731 = vadd.s32 %v573, 20224
        %v732 = vadd.s32 %v573, 20352
        %v733 = vadd.s32 %v573, 20480
        %v734 = vadd.s32 %v573, 20608
        %v735 = vadd.s32 %v573, 20736
        %v736 = vadd.s32 %v573, 20864
        %v737 = vadd.s32 %v573, 20992
        %v738 = vadd.s32 %v573, 21120
        %v739 = vadd.s32 %v573, 21248
        %v740 = vadd.s32 %v573, 21376
        %v741 = vadd.s32 %v573, 21504
        %v742 = vadd.s32 %v573, 21632
        %v743 = vadd.s32 %v573, 21760
        %v744 = vadd.s32 %v573, 21888
        %v745 = vadd.s32 %v573, 22016
        %v746 = vadd.s32 %v573, 22144
        %v747 = vadd.s32 %v573, 22272
        %v748 = vadd.s32 %v573, 22400
        %v749 = vadd.s32 %v573, 22528
        %v750 = vadd.s32 %v573, 22656
        %v751 = vadd.s32 %v573, 22784
        %v752 = vadd.s32 %v573, 22912
        %v753 = vadd.s32 %v573, 23040
        %v754 = vadd.s32 %v573, 23168
        %v755 = vadd.s32 %v573, 23296
        %v756 = vadd.s32 %v573, 23424
        %v757 = vadd.s32 %v573, 23552
        %v758 = vadd.s32 %v573, 23680
        %v759 = vadd.s32 %v573, 23808
        %v760 = vadd.s32 %v573, 23936
        %v761 = vadd.s32 %v573, 24064
        %v762 = vadd.s32 %v573, 24192
        %v763 = vadd.s32 %v573, 24320
        %v764 = vadd.s32 %v573, 24448
        %v765 = vadd.s32 %v573, 24576
        %v766 = vadd.s32 %v573, 24704
        %v767 = vadd.s32 %v573, 24832
        %v768 = vadd.s32 %v573, 24960
        %v769 = vstv %s170
        %v770 = vadd.s32 %v769, %v573
        %v771 = vadd.s32 %v769, %v574
        %v772 = vadd.s32 %v769, %v575
        %v773 = vadd.s32 %v769, %v576
        %v774 = vadd.s32 %v769, %v577
        %v775 = vadd.s32 %v769, %v578
        %v776 = vadd.s32 %v769, %v579
        %v777 = vadd.s32 %v769, %v580
        %v778 = vadd.s32 %v769, %v581
        %v779 = vadd.s32 %v769, %v582
        %v780 = vadd.s32 %v769, %v583
        %v781 = vadd.s32 %v769, %v584
        %v782 = vadd.s32 %v769, %v585
        %v783 = vadd.s32 %v769, %v586
        %v784 = vadd.s32 %v769, %v587
        %v785 = vadd.s32 %v769, %v588
        %v786 = vadd.s32 %v769, %v589
        %v787 = vadd.s32 %v769, %v590
        %v788 = vadd.s32 %v769, %v591
        %v789 = vadd.s32 %v769, %v592
        %v790 = vadd.s32 %v769, %v593
        %v791 = vadd.s32 %v769, %v594
        %v792 = vadd.s32 %v769, %v595
        %v793 = vadd.s32 %v769, %v596
        %v794 = vadd.s32 %v769, %v597
        %v795 = vadd.s32 %v769, %v598
        %v796 = vadd.s32 %v769, %v599
        %v797 = vadd.s32 %v769, %v600
        %v798 = vadd.s32 %v769, %v601
        %v799 = vadd.s32 %v769, %v602
        %v800 = vadd.s32 %v769, %v603
        %v801 = vadd.s32 %v769, %v604
        %v802 = vadd.s32 %v769, %v605
        %v803 = vadd.s32 %v769, %v606
        %v804 = vadd.s32 %v769, %v607
        %v805 = vadd.s32 %v769, %v608
        %v806 = vadd.s32 %v769, %v609
        %v807 = vadd.s32 %v769, %v610
        %v808 = vadd.s32 %v769, %v611
        %v809 = vadd.s32 %v769, %v612
        %v810 = vadd.s32 %v769, %v613
        %v811 = vadd.s32 %v769, %v614
        %v812 = vadd.s32 %v769, %v615
        %v813 = vadd.s32 %v769, %v616
        %v814 = vadd.s32 %v769, %v617
        %v815 = vadd.s32 %v769, %v618
        %v816 = vadd.s32 %v769, %v619
        %v817 = vadd.s32 %v769, %v620
        %v818 = vadd.s32 %v769, %v621
        %v819 = vadd.s32 %v769, %v622
        %v820 = vadd.s32 %v769, %v623
        %v821 = vadd.s32 %v769, %v624
        %v822 = vadd.s32 %v769, %v625
        %v823 = vadd.s32 %v769, %v626
        %v824 = vadd.s32 %v769, %v627
        %v825 = vadd.s32 %v769, %v628
        %v826 = vadd.s32 %v769, %v629
        %v827 = vadd.s32 %v769, %v630
        %v828 = vadd.s32 %v769, %v631
        %v829 = vadd.s32 %v769, %v632
        %v830 = vadd.s32 %v769, %v633
        %v831 = vadd.s32 %v769, %v634
        %v832 = vadd.s32 %v769, %v635
        %v833 = vadd.s32 %v769, %v636
        %v834 = vadd.s32 %v769, %v637
        %v835 = vadd.s32 %v769, %v638
        %v836 = vadd.s32 %v769, %v639
        %v837 = vadd.s32 %v769, %v640
        %v838 = vadd.s32 %v769, %v641
        %v839 = vadd.s32 %v769, %v642
        %v840 = vadd.s32 %v769, %v643
        %v841 = vadd.s32 %v769, %v644
        %v842 = vadd.s32 %v769, %v645
        %v843 = vadd.s32 %v769, %v646
        %v844 = vadd.s32 %v769, %v647
        %v845 = vadd.s32 %v769, %v648
        %v846 = vadd.s32 %v769, %v649
        %v847 = vadd.s32 %v769, %v650
        %v848 = vadd.s32 %v769, %v651
        %v849 = vadd.s32 %v769, %v652
        %v850 = vadd.s32 %v769, %v653
        %v851 = vadd.s32 %v769, %v654
        %v852 = vadd.s32 %v769, %v655
        %v853 = vadd.s32 %v769, %v656
        %v854 = vadd.s32 %v769, %v657
        %v855 = vadd.s32 %v769, %v658
        %v856 = vadd.s32 %v769, %v659
        %v857 = vadd.s32 %v769, %v660
        %v858 = vadd.s32 %v769, %v661
        %v859 = vadd.s32 %v769, %v662
        %v860 = vadd.s32 %v769, %v663
        %v861 = vadd.s32 %v769, %v664
        %v862 = vadd.s32 %v769, %v665
        %v863 = vadd.s32 %v769, %v666
        %v864 = vadd.s32 %v769, %v667
        %v865 = vadd.s32 %v769, %v668
        %v866 = vadd.s32 %v769, %v669
        %v867 = vadd.s32 %v769, %v670
        %v868 = vadd.s32 %v769, %v671
        %v869 = vadd.s32 %v769, %v672
        %v870 = vadd.s32 %v769, %v673
        %v871 = vadd.s32 %v769, %v674
        %v872 = vadd.s32 %v769, %v675
        %v873 = vadd.s32 %v769, %v676
        %v874 = vadd.s32 %v769, %v677
        %v875 = vadd.s32 %v769, %v678
        %v876 = vadd.s32 %v769, %v679
        %v877 = vadd.s32 %v769, %v680
        %v878 = vadd.s32 %v769, %v681
        %v879 = vadd.s32 %v769, %v682
        %v880 = vadd.s32 %v769, %v683
        %v881 = vadd.s32 %v769, %v684
        %v882 = vadd.s32 %v769, %v685
        %v883 = vadd.s32 %v769, %v686
        %v884 = vadd.s32 %v769, %v687
        %v885 = vadd.s32 %v769, %v688
        %v886 = vadd.s32 %v769, %v689
        %v887 = vadd.s32 %v769, %v690
        %v888 = vadd.s32 %v769, %v691
        %v889 = vadd.s32 %v769, %v692
        %v890 = vadd.s32 %v769, %v693
        %v891 = vadd.s32 %v769, %v694
        %v892 = vadd.s32 %v769, %v695
        %v893 = vadd.s32 %v769, %v696
        %v894 = vadd.s32 %v769, %v697
        %v895 = vadd.s32 %v769, %v698
        %v896 = vadd.s32 %v769, %v699
        %v897 = vadd.s32 %v769, %v700
        %v898 = vadd.s32 %v769, %v701
        %v899 = vadd.s32 %v769, %v702
        %v900 = vadd.s32 %v769, %v703
        %v901 = vadd.s32 %v769, %v704
        %v902 = vadd.s32 %v769, %v705
        %v903 = vadd.s32 %v769, %v706
        %v904 = vadd.s32 %v769, %v707
        %v905 = vadd.s32 %v769, %v708
        %v906 = vadd.s32 %v769, %v709
        %v907 = vadd.s32 %v769, %v710
        %v908 = vadd.s32 %v769, %v711
        %v909 = vadd.s32 %v769, %v712
        %v910 = vadd.s32 %v769, %v713
        %v911 = vadd.s32 %v769, %v714
        %v912 = vadd.s32 %v769, %v715
        %v913 = vadd.s32 %v769, %v716
        %v914 = vadd.s32 %v769, %v717
        %v915 = vadd.s32 %v769, %v718
        %v916 = vadd.s32 %v769, %v719
        %v917 = vadd.s32 %v769, %v720
        %v918 = vadd.s32 %v769, %v721
        %v919 = vadd.s32 %v769, %v722
        %v920 = vadd.s32 %v769, %v723
        %v921 = vadd.s32 %v769, %v724
        %v922 = vadd.s32 %v769, %v725
        %v923 = vadd.s32 %v769, %v726
        %v924 = vadd.s32 %v769, %v727
        %v925 = vadd.s32 %v769, %v728
        %v926 = vadd.s32 %v769, %v729
        %v927 = vadd.s32 %v769, %v730
        %v928 = vadd.s32 %v769, %v731
        %v929 = vadd.s32 %v769, %v732
        %v930 = vadd.s32 %v769, %v733
        %v931 = vadd.s32 %v769, %v734
        %v932 = vadd.s32 %v769, %v735
        %v933 = vadd.s32 %v769, %v736
        %v934 = vadd.s32 %v769, %v737
        %v935 = vadd.s32 %v769, %v738
        %v936 = vadd.s32 %v769, %v739
        %v937 = vadd.s32 %v769, %v740
        %v938 = vadd.s32 %v769, %v741
        %v939 = vadd.s32 %v769, %v742
        %v940 = vadd.s32 %v769, %v743
        %v941 = vadd.s32 %v769, %v744
        %v942 = vadd.s32 %v769, %v745
        %v943 = vadd.s32 %v769, %v746
        %v944 = vadd.s32 %v769, %v747
        %v945 = vadd.s32 %v769, %v748
        %v946 = vadd.s32 %v769, %v749
        %v947 = vadd.s32 %v769, %v750
        %v948 = vadd.s32 %v769, %v751
        %v949 = vadd.s32 %v769, %v752
        %v950 = vadd.s32 %v769, %v753
        %v951 = vadd.s32 %v769, %v754
        %v952 = vadd.s32 %v769, %v755
        %v953 = vadd.s32 %v769, %v756
        %v954 = vadd.s32 %v769, %v757
        %v955 = vadd.s32 %v769, %v758
        %v956 = vadd.s32 %v769, %v759
        %v957 = vadd.s32 %v769, %v760
        %v958 = vadd.s32 %v769, %v761
        %v959 = vadd.s32 %v769, %v762
        %v960 = vadd.s32 %v769, %v763
        %v961 = vadd.s32 %v769, %v764
        %v962 = vadd.s32 %v769, %v765
        %v963 = vadd.s32 %v769, %v766
        %v964 = vadd.s32 %v769, %v767
        %v965 = vadd.s32 %v769, %v768
        %vm966 = vcmp.ge.s32.totalorder %v770, 27776
        %vm967 = vcmp.ge.s32.totalorder %v771, 27776
        %vm968 = vcmp.ge.s32.totalorder %v772, 27776
        %vm969 = vcmp.ge.s32.totalorder %v773, 27776
        %vm970 = vcmp.ge.s32.totalorder %v774, 27776
        %vm971 = vcmp.ge.s32.totalorder %v775, 27776
        %vm972 = vcmp.ge.s32.totalorder %v776, 27776
        %vm973 = vcmp.ge.s32.totalorder %v777, 27776
        %vm974 = vcmp.ge.s32.totalorder %v778, 27776
        %vm975 = vcmp.ge.s32.totalorder %v779, 27776
        %vm976 = vcmp.ge.s32.totalorder %v780, 27776
        %vm977 = vcmp.ge.s32.totalorder %v781, 27776
        %vm978 = vcmp.ge.s32.totalorder %v782, 27776
        %vm979 = vcmp.ge.s32.totalorder %v783, 27776
        %vm980 = vcmp.ge.s32.totalorder %v784, 27776
        %vm981 = vcmp.ge.s32.totalorder %v785, 27776
        %vm982 = vcmp.ge.s32.totalorder %v786, 27776
        %vm983 = vcmp.ge.s32.totalorder %v787, 27776
        %vm984 = vcmp.ge.s32.totalorder %v788, 27776
        %vm985 = vcmp.ge.s32.totalorder %v789, 27776
        %vm986 = vcmp.ge.s32.totalorder %v790, 27776
        %vm987 = vcmp.ge.s32.totalorder %v791, 27776
        %vm988 = vcmp.ge.s32.totalorder %v792, 27776
        %vm989 = vcmp.ge.s32.totalorder %v793, 27776
        %vm990 = vcmp.ge.s32.totalorder %v794, 27776
        %vm991 = vcmp.ge.s32.totalorder %v795, 27776
        %vm992 = vcmp.ge.s32.totalorder %v796, 27776
        %vm993 = vcmp.ge.s32.totalorder %v797, 27776
        %vm994 = vcmp.ge.s32.totalorder %v798, 27776
        %vm995 = vcmp.ge.s32.totalorder %v799, 27776
        %vm996 = vcmp.ge.s32.totalorder %v800, 27776
        %vm997 = vcmp.ge.s32.totalorder %v801, 27776
        %vm998 = vcmp.ge.s32.totalorder %v802, 27776
        %vm999 = vcmp.ge.s32.totalorder %v803, 27776
        %vm1000 = vcmp.ge.s32.totalorder %v804, 27776
        %vm1001 = vcmp.ge.s32.totalorder %v805, 27776
        %vm1002 = vcmp.ge.s32.totalorder %v806, 27776
        %vm1003 = vcmp.ge.s32.totalorder %v807, 27776
        %vm1004 = vcmp.ge.s32.totalorder %v808, 27776
        %vm1005 = vcmp.ge.s32.totalorder %v809, 27776
        %vm1006 = vcmp.ge.s32.totalorder %v810, 27776
        %vm1007 = vcmp.ge.s32.totalorder %v811, 27776
        %vm1008 = vcmp.ge.s32.totalorder %v812, 27776
        %vm1009 = vcmp.ge.s32.totalorder %v813, 27776
        %vm1010 = vcmp.ge.s32.totalorder %v814, 27776
        %vm1011 = vcmp.ge.s32.totalorder %v815, 27776
        %vm1012 = vcmp.ge.s32.totalorder %v816, 27776
        %vm1013 = vcmp.ge.s32.totalorder %v817, 27776
        %vm1014 = vcmp.ge.s32.totalorder %v818, 27776
        %vm1015 = vcmp.ge.s32.totalorder %v819, 27776
        %vm1016 = vcmp.ge.s32.totalorder %v820, 27776
        %vm1017 = vcmp.ge.s32.totalorder %v821, 27776
        %vm1018 = vcmp.ge.s32.totalorder %v822, 27776
        %vm1019 = vcmp.ge.s32.totalorder %v823, 27776
        %vm1020 = vcmp.ge.s32.totalorder %v824, 27776
        %vm1021 = vcmp.ge.s32.totalorder %v825, 27776
        %vm1022 = vcmp.ge.s32.totalorder %v826, 27776
        %vm1023 = vcmp.ge.s32.totalorder %v827, 27776
        %vm1024 = vcmp.ge.s32.totalorder %v828, 27776
        %vm1025 = vcmp.ge.s32.totalorder %v829, 27776
        %vm1026 = vcmp.ge.s32.totalorder %v830, 27776
        %vm1027 = vcmp.ge.s32.totalorder %v831, 27776
        %vm1028 = vcmp.ge.s32.totalorder %v832, 27776
        %vm1029 = vcmp.ge.s32.totalorder %v833, 27776
        %vm1030 = vcmp.ge.s32.totalorder %v834, 27776
        %vm1031 = vcmp.ge.s32.totalorder %v835, 27776
        %vm1032 = vcmp.ge.s32.totalorder %v836, 27776
        %vm1033 = vcmp.ge.s32.totalorder %v837, 27776
        %vm1034 = vcmp.ge.s32.totalorder %v838, 27776
        %vm1035 = vcmp.ge.s32.totalorder %v839, 27776
        %vm1036 = vcmp.ge.s32.totalorder %v840, 27776
        %vm1037 = vcmp.ge.s32.totalorder %v841, 27776
        %vm1038 = vcmp.ge.s32.totalorder %v842, 27776
        %vm1039 = vcmp.ge.s32.totalorder %v843, 27776
        %vm1040 = vcmp.ge.s32.totalorder %v844, 27776
        %vm1041 = vcmp.ge.s32.totalorder %v845, 27776
        %vm1042 = vcmp.ge.s32.totalorder %v846, 27776
        %vm1043 = vcmp.ge.s32.totalorder %v847, 27776
        %vm1044 = vcmp.ge.s32.totalorder %v848, 27776
        %vm1045 = vcmp.ge.s32.totalorder %v849, 27776
        %vm1046 = vcmp.ge.s32.totalorder %v850, 27776
        %vm1047 = vcmp.ge.s32.totalorder %v851, 27776
        %vm1048 = vcmp.ge.s32.totalorder %v852, 27776
        %vm1049 = vcmp.ge.s32.totalorder %v853, 27776
        %vm1050 = vcmp.ge.s32.totalorder %v854, 27776
        %vm1051 = vcmp.ge.s32.totalorder %v855, 27776
        %vm1052 = vcmp.ge.s32.totalorder %v856, 27776
        %vm1053 = vcmp.ge.s32.totalorder %v857, 27776
        %vm1054 = vcmp.ge.s32.totalorder %v858, 27776
        %vm1055 = vcmp.ge.s32.totalorder %v859, 27776
        %vm1056 = vcmp.ge.s32.totalorder %v860, 27776
        %vm1057 = vcmp.ge.s32.totalorder %v861, 27776
        %vm1058 = vcmp.ge.s32.totalorder %v862, 27776
        %vm1059 = vcmp.ge.s32.totalorder %v863, 27776
        %vm1060 = vcmp.ge.s32.totalorder %v864, 27776
        %vm1061 = vcmp.ge.s32.totalorder %v865, 27776
        %vm1062 = vcmp.ge.s32.totalorder %v866, 27776
        %vm1063 = vcmp.ge.s32.totalorder %v867, 27776
        %vm1064 = vcmp.ge.s32.totalorder %v868, 27776
        %vm1065 = vcmp.ge.s32.totalorder %v869, 27776
        %vm1066 = vcmp.ge.s32.totalorder %v870, 27776
        %vm1067 = vcmp.ge.s32.totalorder %v871, 27776
        %vm1068 = vcmp.ge.s32.totalorder %v872, 27776
        %vm1069 = vcmp.ge.s32.totalorder %v873, 27776
        %vm1070 = vcmp.ge.s32.totalorder %v874, 27776
        %vm1071 = vcmp.ge.s32.totalorder %v875, 27776
        %vm1072 = vcmp.ge.s32.totalorder %v876, 27776
        %vm1073 = vcmp.ge.s32.totalorder %v877, 27776
        %vm1074 = vcmp.ge.s32.totalorder %v878, 27776
        %vm1075 = vcmp.ge.s32.totalorder %v879, 27776
        %vm1076 = vcmp.ge.s32.totalorder %v880, 27776
        %vm1077 = vcmp.ge.s32.totalorder %v881, 27776
        %vm1078 = vcmp.ge.s32.totalorder %v882, 27776
        %vm1079 = vcmp.ge.s32.totalorder %v883, 27776
        %vm1080 = vcmp.ge.s32.totalorder %v884, 27776
        %vm1081 = vcmp.ge.s32.totalorder %v885, 27776
        %vm1082 = vcmp.ge.s32.totalorder %v886, 27776
        %vm1083 = vcmp.ge.s32.totalorder %v887, 27776
        %vm1084 = vcmp.ge.s32.totalorder %v888, 27776
        %vm1085 = vcmp.ge.s32.totalorder %v889, 27776
        %vm1086 = vcmp.ge.s32.totalorder %v890, 27776
        %vm1087 = vcmp.ge.s32.totalorder %v891, 27776
        %vm1088 = vcmp.ge.s32.totalorder %v892, 27776
        %vm1089 = vcmp.ge.s32.totalorder %v893, 27776
        %vm1090 = vcmp.ge.s32.totalorder %v894, 27776
        %vm1091 = vcmp.ge.s32.totalorder %v895, 27776
        %vm1092 = vcmp.ge.s32.totalorder %v896, 27776
        %vm1093 = vcmp.ge.s32.totalorder %v897, 27776
        %vm1094 = vcmp.ge.s32.totalorder %v898, 27776
        %vm1095 = vcmp.ge.s32.totalorder %v899, 27776
        %vm1096 = vcmp.ge.s32.totalorder %v900, 27776
        %vm1097 = vcmp.ge.s32.totalorder %v901, 27776
        %vm1098 = vcmp.ge.s32.totalorder %v902, 27776
        %vm1099 = vcmp.ge.s32.totalorder %v903, 27776
        %vm1100 = vcmp.ge.s32.totalorder %v904, 27776
        %vm1101 = vcmp.ge.s32.totalorder %v905, 27776
        %vm1102 = vcmp.ge.s32.totalorder %v906, 27776
        %vm1103 = vcmp.ge.s32.totalorder %v907, 27776
        %vm1104 = vcmp.ge.s32.totalorder %v908, 27776
        %vm1105 = vcmp.ge.s32.totalorder %v909, 27776
        %vm1106 = vcmp.ge.s32.totalorder %v910, 27776
        %vm1107 = vcmp.ge.s32.totalorder %v911, 27776
        %vm1108 = vcmp.ge.s32.totalorder %v912, 27776
        %vm1109 = vcmp.ge.s32.totalorder %v913, 27776
        %vm1110 = vcmp.ge.s32.totalorder %v914, 27776
        %vm1111 = vcmp.ge.s32.totalorder %v915, 27776
        %vm1112 = vcmp.ge.s32.totalorder %v916, 27776
        %vm1113 = vcmp.ge.s32.totalorder %v917, 27776
        %vm1114 = vcmp.ge.s32.totalorder %v918, 27776
        %vm1115 = vcmp.ge.s32.totalorder %v919, 27776
        %vm1116 = vcmp.ge.s32.totalorder %v920, 27776
        %vm1117 = vcmp.ge.s32.totalorder %v921, 27776
        %vm1118 = vcmp.ge.s32.totalorder %v922, 27776
        %vm1119 = vcmp.ge.s32.totalorder %v923, 27776
        %vm1120 = vcmp.ge.s32.totalorder %v924, 27776
        %vm1121 = vcmp.ge.s32.totalorder %v925, 27776
        %vm1122 = vcmp.ge.s32.totalorder %v926, 27776
        %vm1123 = vcmp.ge.s32.totalorder %v927, 27776
        %vm1124 = vcmp.ge.s32.totalorder %v928, 27776
        %vm1125 = vcmp.ge.s32.totalorder %v929, 27776
        %vm1126 = vcmp.ge.s32.totalorder %v930, 27776
        %vm1127 = vcmp.ge.s32.totalorder %v931, 27776
        %vm1128 = vcmp.ge.s32.totalorder %v932, 27776
        %vm1129 = vcmp.ge.s32.totalorder %v933, 27776
        %vm1130 = vcmp.ge.s32.totalorder %v934, 27776
        %vm1131 = vcmp.ge.s32.totalorder %v935, 27776
        %vm1132 = vcmp.ge.s32.totalorder %v936, 27776
        %vm1133 = vcmp.ge.s32.totalorder %v937, 27776
        %vm1134 = vcmp.ge.s32.totalorder %v938, 27776
        %vm1135 = vcmp.ge.s32.totalorder %v939, 27776
        %vm1136 = vcmp.ge.s32.totalorder %v940, 27776
        %vm1137 = vcmp.ge.s32.totalorder %v941, 27776
        %vm1138 = vcmp.ge.s32.totalorder %v942, 27776
        %vm1139 = vcmp.ge.s32.totalorder %v943, 27776
        %vm1140 = vcmp.ge.s32.totalorder %v944, 27776
        %vm1141 = vcmp.ge.s32.totalorder %v945, 27776
        %vm1142 = vcmp.ge.s32.totalorder %v946, 27776
        %vm1143 = vcmp.ge.s32.totalorder %v947, 27776
        %vm1144 = vcmp.ge.s32.totalorder %v948, 27776
        %vm1145 = vcmp.ge.s32.totalorder %v949, 27776
        %vm1146 = vcmp.ge.s32.totalorder %v950, 27776
        %vm1147 = vcmp.ge.s32.totalorder %v951, 27776
        %vm1148 = vcmp.ge.s32.totalorder %v952, 27776
        %vm1149 = vcmp.ge.s32.totalorder %v953, 27776
        %vm1150 = vcmp.ge.s32.totalorder %v954, 27776
        %vm1151 = vcmp.ge.s32.totalorder %v955, 27776
        %vm1152 = vcmp.ge.s32.totalorder %v956, 27776
        %vm1153 = vcmp.ge.s32.totalorder %v957, 27776
        %vm1154 = vcmp.ge.s32.totalorder %v958, 27776
        %vm1155 = vcmp.ge.s32.totalorder %v959, 27776
        %vm1156 = vcmp.ge.s32.totalorder %v960, 27776
        %vm1157 = vcmp.ge.s32.totalorder %v961, 27776
        %vm1158 = vcmp.ge.s32.totalorder %v962, 27776
        %vm1159 = vcmp.ge.s32.totalorder %v963, 27776
        %vm1160 = vcmp.ge.s32.totalorder %v964, 27776
        %vm1161 = vcmp.ge.s32.totalorder %v965, 27776
        %v1162 = vsel %vm966, 1, 0
        %v1163 = vsel %vm967, 1, 0
        %v1164 = vsel %vm968, 1, 0
        %v1165 = vsel %vm969, 1, 0
        %v1166 = vsel %vm970, 1, 0
        %v1167 = vsel %vm971, 1, 0
        %v1168 = vsel %vm972, 1, 0
        %v1169 = vsel %vm973, 1, 0
        %v1170 = vsel %vm974, 1, 0
        %v1171 = vsel %vm975, 1, 0
        %v1172 = vsel %vm976, 1, 0
        %v1173 = vsel %vm977, 1, 0
        %v1174 = vsel %vm978, 1, 0
        %v1175 = vsel %vm979, 1, 0
        %v1176 = vsel %vm980, 1, 0
        %v1177 = vsel %vm981, 1, 0
        %v1178 = vsel %vm982, 1, 0
        %v1179 = vsel %vm983, 1, 0
        %v1180 = vsel %vm984, 1, 0
        %v1181 = vsel %vm985, 1, 0
        %v1182 = vsel %vm986, 1, 0
        %v1183 = vsel %vm987, 1, 0
        %v1184 = vsel %vm988, 1, 0
        %v1185 = vsel %vm989, 1, 0
        %v1186 = vsel %vm990, 1, 0
        %v1187 = vsel %vm991, 1, 0
        %v1188 = vsel %vm992, 1, 0
        %v1189 = vsel %vm993, 1, 0
        %v1190 = vsel %vm994, 1, 0
        %v1191 = vsel %vm995, 1, 0
        %v1192 = vsel %vm996, 1, 0
        %v1193 = vsel %vm997, 1, 0
        %v1194 = vsel %vm998, 1, 0
        %v1195 = vsel %vm999, 1, 0
        %v1196 = vsel %vm1000, 1, 0
        %v1197 = vsel %vm1001, 1, 0
        %v1198 = vsel %vm1002, 1, 0
        %v1199 = vsel %vm1003, 1, 0
        %v1200 = vsel %vm1004, 1, 0
        %v1201 = vsel %vm1005, 1, 0
        %v1202 = vsel %vm1006, 1, 0
        %v1203 = vsel %vm1007, 1, 0
        %v1204 = vsel %vm1008, 1, 0
        %v1205 = vsel %vm1009, 1, 0
        %v1206 = vsel %vm1010, 1, 0
        %v1207 = vsel %vm1011, 1, 0
        %v1208 = vsel %vm1012, 1, 0
        %v1209 = vsel %vm1013, 1, 0
        %v1210 = vsel %vm1014, 1, 0
        %v1211 = vsel %vm1015, 1, 0
        %v1212 = vsel %vm1016, 1, 0
        %v1213 = vsel %vm1017, 1, 0
        %v1214 = vsel %vm1018, 1, 0
        %v1215 = vsel %vm1019, 1, 0
        %v1216 = vsel %vm1020, 1, 0
        %v1217 = vsel %vm1021, 1, 0
        %v1218 = vsel %vm1022, 1, 0
        %v1219 = vsel %vm1023, 1, 0
        %v1220 = vsel %vm1024, 1, 0
        %v1221 = vsel %vm1025, 1, 0
        %v1222 = vsel %vm1026, 1, 0
        %v1223 = vsel %vm1027, 1, 0
        %v1224 = vsel %vm1028, 1, 0
        %v1225 = vsel %vm1029, 1, 0
        %v1226 = vsel %vm1030, 1, 0
        %v1227 = vsel %vm1031, 1, 0
        %v1228 = vsel %vm1032, 1, 0
        %v1229 = vsel %vm1033, 1, 0
        %v1230 = vsel %vm1034, 1, 0
        %v1231 = vsel %vm1035, 1, 0
        %v1232 = vsel %vm1036, 1, 0
        %v1233 = vsel %vm1037, 1, 0
        %v1234 = vsel %vm1038, 1, 0
        %v1235 = vsel %vm1039, 1, 0
        %v1236 = vsel %vm1040, 1, 0
        %v1237 = vsel %vm1041, 1, 0
        %v1238 = vsel %vm1042, 1, 0
        %v1239 = vsel %vm1043, 1, 0
        %v1240 = vsel %vm1044, 1, 0
        %v1241 = vsel %vm1045, 1, 0
        %v1242 = vsel %vm1046, 1, 0
        %v1243 = vsel %vm1047, 1, 0
        %v1244 = vsel %vm1048, 1, 0
        %v1245 = vsel %vm1049, 1, 0
        %v1246 = vsel %vm1050, 1, 0
        %v1247 = vsel %vm1051, 1, 0
        %v1248 = vsel %vm1052, 1, 0
        %v1249 = vsel %vm1053, 1, 0
        %v1250 = vsel %vm1054, 1, 0
        %v1251 = vsel %vm1055, 1, 0
        %v1252 = vsel %vm1056, 1, 0
        %v1253 = vsel %vm1057, 1, 0
        %v1254 = vsel %vm1058, 1, 0
        %v1255 = vsel %vm1059, 1, 0
        %v1256 = vsel %vm1060, 1, 0
        %v1257 = vsel %vm1061, 1, 0
        %v1258 = vsel %vm1062, 1, 0
        %v1259 = vsel %vm1063, 1, 0
        %v1260 = vsel %vm1064, 1, 0
        %v1261 = vsel %vm1065, 1, 0
        %v1262 = vsel %vm1066, 1, 0
        %v1263 = vsel %vm1067, 1, 0
        %v1264 = vsel %vm1068, 1, 0
        %v1265 = vsel %vm1069, 1, 0
        %v1266 = vsel %vm1070, 1, 0
        %v1267 = vsel %vm1071, 1, 0
        %v1268 = vsel %vm1072, 1, 0
        %v1269 = vsel %vm1073, 1, 0
        %v1270 = vsel %vm1074, 1, 0
        %v1271 = vsel %vm1075, 1, 0
        %v1272 = vsel %vm1076, 1, 0
        %v1273 = vsel %vm1077, 1, 0
        %v1274 = vsel %vm1078, 1, 0
        %v1275 = vsel %vm1079, 1, 0
        %v1276 = vsel %vm1080, 1, 0
        %v1277 = vsel %vm1081, 1, 0
        %v1278 = vsel %vm1082, 1, 0
        %v1279 = vsel %vm1083, 1, 0
        %v1280 = vsel %vm1084, 1, 0
        %v1281 = vsel %vm1085, 1, 0
        %v1282 = vsel %vm1086, 1, 0
        %v1283 = vsel %vm1087, 1, 0
        %v1284 = vsel %vm1088, 1, 0
        %v1285 = vsel %vm1089, 1, 0
        %v1286 = vsel %vm1090, 1, 0
        %v1287 = vsel %vm1091, 1, 0
        %v1288 = vsel %vm1092, 1, 0
        %v1289 = vsel %vm1093, 1, 0
        %v1290 = vsel %vm1094, 1, 0
        %v1291 = vsel %vm1095, 1, 0
        %v1292 = vsel %vm1096, 1, 0
        %v1293 = vsel %vm1097, 1, 0
        %v1294 = vsel %vm1098, 1, 0
        %v1295 = vsel %vm1099, 1, 0
        %v1296 = vsel %vm1100, 1, 0
        %v1297 = vsel %vm1101, 1, 0
        %v1298 = vsel %vm1102, 1, 0
        %v1299 = vsel %vm1103, 1, 0
        %v1300 = vsel %vm1104, 1, 0
        %v1301 = vsel %vm1105, 1, 0
        %v1302 = vsel %vm1106, 1, 0
        %v1303 = vsel %vm1107, 1, 0
        %v1304 = vsel %vm1108, 1, 0
        %v1305 = vsel %vm1109, 1, 0
        %v1306 = vsel %vm1110, 1, 0
        %v1307 = vsel %vm1111, 1, 0
        %v1308 = vsel %vm1112, 1, 0
        %v1309 = vsel %vm1113, 1, 0
        %v1310 = vsel %vm1114, 1, 0
        %v1311 = vsel %vm1115, 1, 0
        %v1312 = vsel %vm1116, 1, 0
        %v1313 = vsel %vm1117, 1, 0
        %v1314 = vsel %vm1118, 1, 0
        %v1315 = vsel %vm1119, 1, 0
        %v1316 = vsel %vm1120, 1, 0
        %v1317 = vsel %vm1121, 1, 0
        %v1318 = vsel %vm1122, 1, 0
        %v1319 = vsel %vm1123, 1, 0
        %v1320 = vsel %vm1124, 1, 0
        %v1321 = vsel %vm1125, 1, 0
        %v1322 = vsel %vm1126, 1, 0
        %v1323 = vsel %vm1127, 1, 0
        %v1324 = vsel %vm1128, 1, 0
        %v1325 = vsel %vm1129, 1, 0
        %v1326 = vsel %vm1130, 1, 0
        %v1327 = vsel %vm1131, 1, 0
        %v1328 = vsel %vm1132, 1, 0
        %v1329 = vsel %vm1133, 1, 0
        %v1330 = vsel %vm1134, 1, 0
        %v1331 = vsel %vm1135, 1, 0
        %v1332 = vsel %vm1136, 1, 0
        %v1333 = vsel %vm1137, 1, 0
        %v1334 = vsel %vm1138, 1, 0
        %v1335 = vsel %vm1139, 1, 0
        %v1336 = vsel %vm1140, 1, 0
        %v1337 = vsel %vm1141, 1, 0
        %v1338 = vsel %vm1142, 1, 0
        %v1339 = vsel %vm1143, 1, 0
        %v1340 = vsel %vm1144, 1, 0
        %v1341 = vsel %vm1145, 1, 0
        %v1342 = vsel %vm1146, 1, 0
        %v1343 = vsel %vm1147, 1, 0
        %v1344 = vsel %vm1148, 1, 0
        %v1345 = vsel %vm1149, 1, 0
        %v1346 = vsel %vm1150, 1, 0
        %v1347 = vsel %vm1151, 1, 0
        %v1348 = vsel %vm1152, 1, 0
        %v1349 = vsel %vm1153, 1, 0
        %v1350 = vsel %vm1154, 1, 0
        %v1351 = vsel %vm1155, 1, 0
        %v1352 = vsel %vm1156, 1, 0
        %v1353 = vsel %vm1157, 1, 0
        %v1354 = vsel %vm1158, 1, 0
        %v1355 = vsel %vm1159, 1, 0
        %v1356 = vsel %vm1160, 1, 0
        %v1357 = vsel %vm1161, 1, 0
        %v1358 = vcvt.s32.f32 %v1162
        %v1359 = vcvt.s32.f32 %v1163
        %v1360 = vcvt.s32.f32 %v1164
        %v1361 = vcvt.s32.f32 %v1165
        %v1362 = vcvt.s32.f32 %v1166
        %v1363 = vcvt.s32.f32 %v1167
        %v1364 = vcvt.s32.f32 %v1168
        %v1365 = vcvt.s32.f32 %v1169
        %v1366 = vcvt.s32.f32 %v1170
        %v1367 = vcvt.s32.f32 %v1171
        %v1368 = vcvt.s32.f32 %v1172
        %v1369 = vcvt.s32.f32 %v1173
        %v1370 = vcvt.s32.f32 %v1174
        %v1371 = vcvt.s32.f32 %v1175
        %v1372 = vcvt.s32.f32 %v1176
        %v1373 = vcvt.s32.f32 %v1177
        %v1374 = vcvt.s32.f32 %v1178
        %v1375 = vcvt.s32.f32 %v1179
        %v1376 = vcvt.s32.f32 %v1180
        %v1377 = vcvt.s32.f32 %v1181
        %v1378 = vcvt.s32.f32 %v1182
        %v1379 = vcvt.s32.f32 %v1183
        %v1380 = vcvt.s32.f32 %v1184
        %v1381 = vcvt.s32.f32 %v1185
        %v1382 = vcvt.s32.f32 %v1186
        %v1383 = vcvt.s32.f32 %v1187
        %v1384 = vcvt.s32.f32 %v1188
        %v1385 = vcvt.s32.f32 %v1189
        %v1386 = vcvt.s32.f32 %v1190
        %v1387 = vcvt.s32.f32 %v1191
        %v1388 = vcvt.s32.f32 %v1192
        %v1389 = vcvt.s32.f32 %v1193
        %v1390 = vcvt.s32.f32 %v1194
        %v1391 = vcvt.s32.f32 %v1195
        %v1392 = vcvt.s32.f32 %v1196
        %v1393 = vcvt.s32.f32 %v1197
        %v1394 = vcvt.s32.f32 %v1198
        %v1395 = vcvt.s32.f32 %v1199
        %v1396 = vcvt.s32.f32 %v1200
        %v1397 = vcvt.s32.f32 %v1201
        %v1398 = vcvt.s32.f32 %v1202
        %v1399 = vcvt.s32.f32 %v1203
        %v1400 = vcvt.s32.f32 %v1204
        %v1401 = vcvt.s32.f32 %v1205
        %v1402 = vcvt.s32.f32 %v1206
        %v1403 = vcvt.s32.f32 %v1207
        %v1404 = vcvt.s32.f32 %v1208
        %v1405 = vcvt.s32.f32 %v1209
        %v1406 = vcvt.s32.f32 %v1210
        %v1407 = vcvt.s32.f32 %v1211
        %v1408 = vcvt.s32.f32 %v1212
        %v1409 = vcvt.s32.f32 %v1213
        %v1410 = vcvt.s32.f32 %v1214
        %v1411 = vcvt.s32.f32 %v1215
        %v1412 = vcvt.s32.f32 %v1216
        %v1413 = vcvt.s32.f32 %v1217
        %v1414 = vcvt.s32.f32 %v1218
        %v1415 = vcvt.s32.f32 %v1219
        %v1416 = vcvt.s32.f32 %v1220
        %v1417 = vcvt.s32.f32 %v1221
        %v1418 = vcvt.s32.f32 %v1222
        %v1419 = vcvt.s32.f32 %v1223
        %v1420 = vcvt.s32.f32 %v1224
        %v1421 = vcvt.s32.f32 %v1225
        %v1422 = vcvt.s32.f32 %v1226
        %v1423 = vcvt.s32.f32 %v1227
        %v1424 = vcvt.s32.f32 %v1228
        %v1425 = vcvt.s32.f32 %v1229
        %v1426 = vcvt.s32.f32 %v1230
        %v1427 = vcvt.s32.f32 %v1231
        %v1428 = vcvt.s32.f32 %v1232
        %v1429 = vcvt.s32.f32 %v1233
        %v1430 = vcvt.s32.f32 %v1234
        %v1431 = vcvt.s32.f32 %v1235
        %v1432 = vcvt.s32.f32 %v1236
        %v1433 = vcvt.s32.f32 %v1237
        %v1434 = vcvt.s32.f32 %v1238
        %v1435 = vcvt.s32.f32 %v1239
        %v1436 = vcvt.s32.f32 %v1240
        %v1437 = vcvt.s32.f32 %v1241
        %v1438 = vcvt.s32.f32 %v1242
        %v1439 = vcvt.s32.f32 %v1243
        %v1440 = vcvt.s32.f32 %v1244
        %v1441 = vcvt.s32.f32 %v1245
        %v1442 = vcvt.s32.f32 %v1246
        %v1443 = vcvt.s32.f32 %v1247
        %v1444 = vcvt.s32.f32 %v1248
        %v1445 = vcvt.s32.f32 %v1249
        %v1446 = vcvt.s32.f32 %v1250
        %v1447 = vcvt.s32.f32 %v1251
        %v1448 = vcvt.s32.f32 %v1252
        %v1449 = vcvt.s32.f32 %v1253
        %v1450 = vcvt.s32.f32 %v1254
        %v1451 = vcvt.s32.f32 %v1255
        %v1452 = vcvt.s32.f32 %v1256
        %v1453 = vcvt.s32.f32 %v1257
        %v1454 = vcvt.s32.f32 %v1258
        %v1455 = vcvt.s32.f32 %v1259
        %v1456 = vcvt.s32.f32 %v1260
        %v1457 = vcvt.s32.f32 %v1261
        %v1458 = vcvt.s32.f32 %v1262
        %v1459 = vcvt.s32.f32 %v1263
        %v1460 = vcvt.s32.f32 %v1264
        %v1461 = vcvt.s32.f32 %v1265
        %v1462 = vcvt.s32.f32 %v1266
        %v1463 = vcvt.s32.f32 %v1267
        %v1464 = vcvt.s32.f32 %v1268
        %v1465 = vcvt.s32.f32 %v1269
        %v1466 = vcvt.s32.f32 %v1270
        %v1467 = vcvt.s32.f32 %v1271
        %v1468 = vcvt.s32.f32 %v1272
        %v1469 = vcvt.s32.f32 %v1273
        %v1470 = vcvt.s32.f32 %v1274
        %v1471 = vcvt.s32.f32 %v1275
        %v1472 = vcvt.s32.f32 %v1276
        %v1473 = vcvt.s32.f32 %v1277
        %v1474 = vcvt.s32.f32 %v1278
        %v1475 = vcvt.s32.f32 %v1279
        %v1476 = vcvt.s32.f32 %v1280
        %v1477 = vcvt.s32.f32 %v1281
        %v1478 = vcvt.s32.f32 %v1282
        %v1479 = vcvt.s32.f32 %v1283
        %v1480 = vcvt.s32.f32 %v1284
        %v1481 = vcvt.s32.f32 %v1285
        %v1482 = vcvt.s32.f32 %v1286
        %v1483 = vcvt.s32.f32 %v1287
        %v1484 = vcvt.s32.f32 %v1288
        %v1485 = vcvt.s32.f32 %v1289
        %v1486 = vcvt.s32.f32 %v1290
        %v1487 = vcvt.s32.f32 %v1291
        %v1488 = vcvt.s32.f32 %v1292
        %v1489 = vcvt.s32.f32 %v1293
        %v1490 = vcvt.s32.f32 %v1294
        %v1491 = vcvt.s32.f32 %v1295
        %v1492 = vcvt.s32.f32 %v1296
        %v1493 = vcvt.s32.f32 %v1297
        %v1494 = vcvt.s32.f32 %v1298
        %v1495 = vcvt.s32.f32 %v1299
        %v1496 = vcvt.s32.f32 %v1300
        %v1497 = vcvt.s32.f32 %v1301
        %v1498 = vcvt.s32.f32 %v1302
        %v1499 = vcvt.s32.f32 %v1303
        %v1500 = vcvt.s32.f32 %v1304
        %v1501 = vcvt.s32.f32 %v1305
        %v1502 = vcvt.s32.f32 %v1306
        %v1503 = vcvt.s32.f32 %v1307
        %v1504 = vcvt.s32.f32 %v1308
        %v1505 = vcvt.s32.f32 %v1309
        %v1506 = vcvt.s32.f32 %v1310
        %v1507 = vcvt.s32.f32 %v1311
        %v1508 = vcvt.s32.f32 %v1312
        %v1509 = vcvt.s32.f32 %v1313
        %v1510 = vcvt.s32.f32 %v1314
        %v1511 = vcvt.s32.f32 %v1315
        %v1512 = vcvt.s32.f32 %v1316
        %v1513 = vcvt.s32.f32 %v1317
        %v1514 = vcvt.s32.f32 %v1318
        %v1515 = vcvt.s32.f32 %v1319
        %v1516 = vcvt.s32.f32 %v1320
        %v1517 = vcvt.s32.f32 %v1321
        %v1518 = vcvt.s32.f32 %v1322
        %v1519 = vcvt.s32.f32 %v1323
        %v1520 = vcvt.s32.f32 %v1324
        %v1521 = vcvt.s32.f32 %v1325
        %v1522 = vcvt.s32.f32 %v1326
        %v1523 = vcvt.s32.f32 %v1327
        %v1524 = vcvt.s32.f32 %v1328
        %v1525 = vcvt.s32.f32 %v1329
        %v1526 = vcvt.s32.f32 %v1330
        %v1527 = vcvt.s32.f32 %v1331
        %v1528 = vcvt.s32.f32 %v1332
        %v1529 = vcvt.s32.f32 %v1333
        %v1530 = vcvt.s32.f32 %v1334
        %v1531 = vcvt.s32.f32 %v1335
        %v1532 = vcvt.s32.f32 %v1336
        %v1533 = vcvt.s32.f32 %v1337
        %v1534 = vcvt.s32.f32 %v1338
        %v1535 = vcvt.s32.f32 %v1339
        %v1536 = vcvt.s32.f32 %v1340
        %v1537 = vcvt.s32.f32 %v1341
        %v1538 = vcvt.s32.f32 %v1342
        %v1539 = vcvt.s32.f32 %v1343
        %v1540 = vcvt.s32.f32 %v1344
        %v1541 = vcvt.s32.f32 %v1345
        %v1542 = vcvt.s32.f32 %v1346
        %v1543 = vcvt.s32.f32 %v1347
        %v1544 = vcvt.s32.f32 %v1348
        %v1545 = vcvt.s32.f32 %v1349
        %v1546 = vcvt.s32.f32 %v1350
        %v1547 = vcvt.s32.f32 %v1351
        %v1548 = vcvt.s32.f32 %v1352
        %v1549 = vcvt.s32.f32 %v1353
        %v1550 = vcvt.s32.f32 %v1354
        %v1551 = vcvt.s32.f32 %v1355
        %v1552 = vcvt.s32.f32 %v1356
        %v1553 = vcvt.s32.f32 %v1357
        %v1554 = vmul.f32 %v376, %v1358
        %v1555 = vmul.f32 %v377, %v1359
        %v1556 = vmul.f32 %v378, %v1360
        %v1557 = vmul.f32 %v379, %v1361
        %v1558 = vmul.f32 %v380, %v1362
        %v1559 = vmul.f32 %v381, %v1363
        %v1560 = vmul.f32 %v382, %v1364
        %v1561 = vmul.f32 %v383, %v1365
        %v1562 = vmul.f32 %v384, %v1366
        %v1563 = vmul.f32 %v385, %v1367
        %v1564 = vmul.f32 %v386, %v1368
        %v1565 = vmul.f32 %v387, %v1369
        %v1566 = vmul.f32 %v388, %v1370
        %v1567 = vmul.f32 %v389, %v1371
        %v1568 = vmul.f32 %v390, %v1372
        %v1569 = vmul.f32 %v391, %v1373
        %v1570 = vmul.f32 %v392, %v1374
        %v1571 = vmul.f32 %v393, %v1375
        %v1572 = vmul.f32 %v394, %v1376
        %v1573 = vmul.f32 %v395, %v1377
        %v1574 = vmul.f32 %v396, %v1378
        %v1575 = vmul.f32 %v397, %v1379
        %v1576 = vmul.f32 %v398, %v1380
        %v1577 = vmul.f32 %v399, %v1381
        %v1578 = vmul.f32 %v400, %v1382
        %v1579 = vmul.f32 %v401, %v1383
        %v1580 = vmul.f32 %v402, %v1384
        %v1581 = vmul.f32 %v403, %v1385
        %v1582 = vmul.f32 %v404, %v1386
        %v1583 = vmul.f32 %v405, %v1387
        %v1584 = vmul.f32 %v406, %v1388
        %v1585 = vmul.f32 %v407, %v1389
        %v1586 = vmul.f32 %v408, %v1390
        %v1587 = vmul.f32 %v409, %v1391
        %v1588 = vmul.f32 %v410, %v1392
        %v1589 = vmul.f32 %v411, %v1393
        %v1590 = vmul.f32 %v412, %v1394
        %v1591 = vmul.f32 %v413, %v1395
        %v1592 = vmul.f32 %v414, %v1396
        %v1593 = vmul.f32 %v415, %v1397
        %v1594 = vmul.f32 %v416, %v1398
        %v1595 = vmul.f32 %v417, %v1399
        %v1596 = vmul.f32 %v418, %v1400
        %v1597 = vmul.f32 %v419, %v1401
        %v1598 = vmul.f32 %v420, %v1402
        %v1599 = vmul.f32 %v421, %v1403
        %v1600 = vmul.f32 %v422, %v1404
        %v1601 = vmul.f32 %v423, %v1405
        %v1602 = vmul.f32 %v424, %v1406
        %v1603 = vmul.f32 %v425, %v1407
        %v1604 = vmul.f32 %v426, %v1408
        %v1605 = vmul.f32 %v427, %v1409
        %v1606 = vmul.f32 %v428, %v1410
        %v1607 = vmul.f32 %v429, %v1411
        %v1608 = vmul.f32 %v430, %v1412
        %v1609 = vmul.f32 %v431, %v1413
        %v1610 = vmul.f32 %v432, %v1414
        %v1611 = vmul.f32 %v433, %v1415
        %v1612 = vmul.f32 %v434, %v1416
        %v1613 = vmul.f32 %v435, %v1417
        %v1614 = vmul.f32 %v436, %v1418
        %v1615 = vmul.f32 %v437, %v1419
        %v1616 = vmul.f32 %v438, %v1420
        %v1617 = vmul.f32 %v439, %v1421
        %v1618 = vmul.f32 %v440, %v1422
        %v1619 = vmul.f32 %v441, %v1423
        %v1620 = vmul.f32 %v442, %v1424
        %v1621 = vmul.f32 %v443, %v1425
        %v1622 = vmul.f32 %v444, %v1426
        %v1623 = vmul.f32 %v445, %v1427
        %v1624 = vmul.f32 %v446, %v1428
        %v1625 = vmul.f32 %v447, %v1429
        %v1626 = vmul.f32 %v448, %v1430
        %v1627 = vmul.f32 %v449, %v1431
        %v1628 = vmul.f32 %v450, %v1432
        %v1629 = vmul.f32 %v451, %v1433
        %v1630 = vmul.f32 %v452, %v1434
        %v1631 = vmul.f32 %v453, %v1435
        %v1632 = vmul.f32 %v454, %v1436
        %v1633 = vmul.f32 %v455, %v1437
        %v1634 = vmul.f32 %v456, %v1438
        %v1635 = vmul.f32 %v457, %v1439
        %v1636 = vmul.f32 %v458, %v1440
        %v1637 = vmul.f32 %v459, %v1441
        %v1638 = vmul.f32 %v460, %v1442
        %v1639 = vmul.f32 %v461, %v1443
        %v1640 = vmul.f32 %v462, %v1444
        %v1641 = vmul.f32 %v463, %v1445
        %v1642 = vmul.f32 %v464, %v1446
        %v1643 = vmul.f32 %v465, %v1447
        %v1644 = vmul.f32 %v466, %v1448
        %v1645 = vmul.f32 %v467, %v1449
        %v1646 = vmul.f32 %v468, %v1450
        %v1647 = vmul.f32 %v469, %v1451
        %v1648 = vmul.f32 %v470, %v1452
        %v1649 = vmul.f32 %v471, %v1453
        %v1650 = vmul.f32 %v472, %v1454
        %v1651 = vmul.f32 %v473, %v1455
        %v1652 = vmul.f32 %v474, %v1456
        %v1653 = vmul.f32 %v475, %v1457
        %v1654 = vmul.f32 %v476, %v1458
        %v1655 = vmul.f32 %v477, %v1459
        %v1656 = vmul.f32 %v478, %v1460
        %v1657 = vmul.f32 %v479, %v1461
        %v1658 = vmul.f32 %v480, %v1462
        %v1659 = vmul.f32 %v481, %v1463
        %v1660 = vmul.f32 %v482, %v1464
        %v1661 = vmul.f32 %v483, %v1465
        %v1662 = vmul.f32 %v484, %v1466
        %v1663 = vmul.f32 %v485, %v1467
        %v1664 = vmul.f32 %v486, %v1468
        %v1665 = vmul.f32 %v487, %v1469
        %v1666 = vmul.f32 %v488, %v1470
        %v1667 = vmul.f32 %v489, %v1471
        %v1668 = vmul.f32 %v490, %v1472
        %v1669 = vmul.f32 %v491, %v1473
        %v1670 = vmul.f32 %v492, %v1474
        %v1671 = vmul.f32 %v493, %v1475
        %v1672 = vmul.f32 %v494, %v1476
        %v1673 = vmul.f32 %v495, %v1477
        %v1674 = vmul.f32 %v496, %v1478
        %v1675 = vmul.f32 %v497, %v1479
        %v1676 = vmul.f32 %v498, %v1480
        %v1677 = vmul.f32 %v499, %v1481
        %v1678 = vmul.f32 %v500, %v1482
        %v1679 = vmul.f32 %v501, %v1483
        %v1680 = vmul.f32 %v502, %v1484
        %v1681 = vmul.f32 %v503, %v1485
        %v1682 = vmul.f32 %v504, %v1486
        %v1683 = vmul.f32 %v505, %v1487
        %v1684 = vmul.f32 %v506, %v1488
        %v1685 = vmul.f32 %v507, %v1489
        %v1686 = vmul.f32 %v508, %v1490
        %v1687 = vmul.f32 %v509, %v1491
        %v1688 = vmul.f32 %v510, %v1492
        %v1689 = vmul.f32 %v511, %v1493
        %v1690 = vmul.f32 %v512, %v1494
        %v1691 = vmul.f32 %v513, %v1495
        %v1692 = vmul.f32 %v514, %v1496
        %v1693 = vmul.f32 %v515, %v1497
        %v1694 = vmul.f32 %v516, %v1498
        %v1695 = vmul.f32 %v517, %v1499
        %v1696 = vmul.f32 %v518, %v1500
        %v1697 = vmul.f32 %v519, %v1501
        %v1698 = vmul.f32 %v520, %v1502
        %v1699 = vmul.f32 %v521, %v1503
        %v1700 = vmul.f32 %v522, %v1504
        %v1701 = vmul.f32 %v523, %v1505
        %v1702 = vmul.f32 %v524, %v1506
        %v1703 = vmul.f32 %v525, %v1507
        %v1704 = vmul.f32 %v526, %v1508
        %v1705 = vmul.f32 %v527, %v1509
        %v1706 = vmul.f32 %v528, %v1510
        %v1707 = vmul.f32 %v529, %v1511
        %v1708 = vmul.f32 %v530, %v1512
        %v1709 = vmul.f32 %v531, %v1513
        %v1710 = vmul.f32 %v532, %v1514
        %v1711 = vmul.f32 %v533, %v1515
        %v1712 = vmul.f32 %v534, %v1516
        %v1713 = vmul.f32 %v535, %v1517
        %v1714 = vmul.f32 %v536, %v1518
        %v1715 = vmul.f32 %v537, %v1519
        %v1716 = vmul.f32 %v538, %v1520
        %v1717 = vmul.f32 %v539, %v1521
        %v1718 = vmul.f32 %v540, %v1522
        %v1719 = vmul.f32 %v541, %v1523
        %v1720 = vmul.f32 %v542, %v1524
        %v1721 = vmul.f32 %v543, %v1525
        %v1722 = vmul.f32 %v544, %v1526
        %v1723 = vmul.f32 %v545, %v1527
        %v1724 = vmul.f32 %v546, %v1528
        %v1725 = vmul.f32 %v547, %v1529
        %v1726 = vmul.f32 %v548, %v1530
        %v1727 = vmul.f32 %v549, %v1531
        %v1728 = vmul.f32 %v550, %v1532
        %v1729 = vmul.f32 %v551, %v1533
        %v1730 = vmul.f32 %v552, %v1534
        %v1731 = vmul.f32 %v553, %v1535
        %v1732 = vmul.f32 %v554, %v1536
        %v1733 = vmul.f32 %v555, %v1537
        %v1734 = vmul.f32 %v556, %v1538
        %v1735 = vmul.f32 %v557, %v1539
        %v1736 = vmul.f32 %v558, %v1540
        %v1737 = vmul.f32 %v559, %v1541
        %v1738 = vmul.f32 %v560, %v1542
        %v1739 = vmul.f32 %v561, %v1543
        %v1740 = vmul.f32 %v562, %v1544
        %v1741 = vmul.f32 %v563, %v1545
        %v1742 = vmul.f32 %v564, %v1546
        %v1743 = vmul.f32 %v565, %v1547
        %v1744 = vmul.f32 %v566, %v1548
        %v1745 = vmul.f32 %v567, %v1549
        %v1746 = vmul.f32 %v568, %v1550
        %v1747 = vmul.f32 %v569, %v1551
        %v1748 = vmul.f32 %v570, %v1552
        %v1749 = vmul.f32 %v571, %v1553
        %1750 = vst [vmem:[%s168] sm:$0x3f] %v1554
        %1751 = vst [vmem:[%s168 + $0x8] sm:$0x3f] %v1555
        %1752 = vst [vmem:[%s168 + $0x10] sm:$0x3f] %v1556
        %1753 = vst [vmem:[%s168 + $0x18] sm:$0x3f] %v1557
        %1754 = vst [vmem:[%s168 + $0x20] sm:$0x3f] %v1558
        %1755 = vst [vmem:[%s168 + $0x28] sm:$0x3f] %v1559
        %1756 = vst [vmem:[%s168 + $0x30] sm:$0x3f] %v1560
        %1757 = vst [vmem:[%s168 + $0x38] sm:$0x3f] %v1561
        %1758 = vst [vmem:[%s168 + $0x40] sm:$0x3f] %v1562
        %1759 = vst [vmem:[%s168 + $0x48] sm:$0x3f] %v1563
        %1760 = vst [vmem:[%s168 + $0x50] sm:$0x3f] %v1564
        %1761 = vst [vmem:[%s168 + $0x58] sm:$0x3f] %v1565
        %1762 = vst [vmem:[%s168 + $0x60] sm:$0x3f] %v1566
        %1763 = vst [vmem:[%s168 + $0x68] sm:$0x3f] %v1567
        %1764 = vst [vmem:[%s168 + $0x70] sm:$0x3f] %v1568
        %1765 = vst [vmem:[%s168 + $0x78] sm:$0x3f] %v1569
        %1766 = vst [vmem:[%s168 + $0x80] sm:$0x3f] %v1570
        %1767 = vst [vmem:[%s168 + $0x88] sm:$0x3f] %v1571
        %1768 = vst [vmem:[%s168 + $0x90] sm:$0x3f] %v1572
        %1769 = vst [vmem:[%s168 + $0x98] sm:$0x3f] %v1573
        %1770 = vst [vmem:[%s168 + $0xa0] sm:$0x3f] %v1574
        %1771 = vst [vmem:[%s168 + $0xa8] sm:$0x3f] %v1575
        %1772 = vst [vmem:[%s168 + $0xb0] sm:$0x3f] %v1576
        %1773 = vst [vmem:[%s168 + $0xb8] sm:$0x3f] %v1577
        %1774 = vst [vmem:[%s168 + $0xc0] sm:$0x3f] %v1578
        %1775 = vst [vmem:[%s168 + $0xc8] sm:$0x3f] %v1579
        %1776 = vst [vmem:[%s168 + $0xd0] sm:$0x3f] %v1580
        %1777 = vst [vmem:[%s168 + $0xd8] sm:$0x3f] %v1581
        %1778 = vst [vmem:[%s168 + $0xe0] sm:$0x3f] %v1582
        %1779 = vst [vmem:[%s168 + $0xe8] sm:$0x3f] %v1583
        %1780 = vst [vmem:[%s168 + $0xf0] sm:$0x3f] %v1584
        %1781 = vst [vmem:[%s168 + $0xf8] sm:$0x3f] %v1585
        %1782 = vst [vmem:[%s168 + $0x100] sm:$0x3f] %v1586
        %1783 = vst [vmem:[%s168 + $0x108] sm:$0x3f] %v1587
        %1784 = vst [vmem:[%s168 + $0x110] sm:$0x3f] %v1588
        %1785 = vst [vmem:[%s168 + $0x118] sm:$0x3f] %v1589
        %1786 = vst [vmem:[%s168 + $0x120] sm:$0x3f] %v1590
        %1787 = vst [vmem:[%s168 + $0x128] sm:$0x3f] %v1591
        %1788 = vst [vmem:[%s168 + $0x130] sm:$0x3f] %v1592
        %1789 = vst [vmem:[%s168 + $0x138] sm:$0x3f] %v1593
        %1790 = vst [vmem:[%s168 + $0x140] sm:$0x3f] %v1594
        %1791 = vst [vmem:[%s168 + $0x148] sm:$0x3f] %v1595
        %1792 = vst [vmem:[%s168 + $0x150] sm:$0x3f] %v1596
        %1793 = vst [vmem:[%s168 + $0x158] sm:$0x3f] %v1597
        %1794 = vst [vmem:[%s168 + $0x160] sm:$0x3f] %v1598
        %1795 = vst [vmem:[%s168 + $0x168] sm:$0x3f] %v1599
        %1796 = vst [vmem:[%s168 + $0x170] sm:$0x3f] %v1600
        %1797 = vst [vmem:[%s168 + $0x178] sm:$0x3f] %v1601
        %1798 = vst [vmem:[%s168 + $0x180] sm:$0x3f] %v1602
        %1799 = vst [vmem:[%s168 + $0x188] sm:$0x3f] %v1603
        %1800 = vst [vmem:[%s168 + $0x190] sm:$0x3f] %v1604
        %1801 = vst [vmem:[%s168 + $0x198] sm:$0x3f] %v1605
        %1802 = vst [vmem:[%s168 + $0x1a0] sm:$0x3f] %v1606
        %1803 = vst [vmem:[%s168 + $0x1a8] sm:$0x3f] %v1607
        %1804 = vst [vmem:[%s168 + $0x1b0] sm:$0x3f] %v1608
        %1805 = vst [vmem:[%s168 + $0x1b8] sm:$0x3f] %v1609
        %1806 = vst [vmem:[%s168 + $0x1c0] sm:$0x3f] %v1610
        %1807 = vst [vmem:[%s168 + $0x1c8] sm:$0x3f] %v1611
        %1808 = vst [vmem:[%s168 + $0x1d0] sm:$0x3f] %v1612
        %1809 = vst [vmem:[%s168 + $0x1d8] sm:$0x3f] %v1613
        %1810 = vst [vmem:[%s168 + $0x1e0] sm:$0x3f] %v1614
        %1811 = vst [vmem:[%s168 + $0x1e8] sm:$0x3f] %v1615
        %1812 = vst [vmem:[%s168 + $0x1f0] sm:$0x3f] %v1616
        %1813 = vst [vmem:[%s168 + $0x1f8] sm:$0x3f] %v1617
        %1814 = vst [vmem:[%s168 + $0x200] sm:$0x3f] %v1618
        %1815 = vst [vmem:[%s168 + $0x208] sm:$0x3f] %v1619
        %1816 = vst [vmem:[%s168 + $0x210] sm:$0x3f] %v1620
        %1817 = vst [vmem:[%s168 + $0x218] sm:$0x3f] %v1621
        %1818 = vst [vmem:[%s168 + $0x220] sm:$0x3f] %v1622
        %1819 = vst [vmem:[%s168 + $0x228] sm:$0x3f] %v1623
        %1820 = vst [vmem:[%s168 + $0x230] sm:$0x3f] %v1624
        %1821 = vst [vmem:[%s168 + $0x238] sm:$0x3f] %v1625
        %1822 = vst [vmem:[%s168 + $0x240] sm:$0x3f] %v1626
        %1823 = vst [vmem:[%s168 + $0x248] sm:$0x3f] %v1627
        %1824 = vst [vmem:[%s168 + $0x250] sm:$0x3f] %v1628
        %1825 = vst [vmem:[%s168 + $0x258] sm:$0x3f] %v1629
        %1826 = vst [vmem:[%s168 + $0x260] sm:$0x3f] %v1630
        %1827 = vst [vmem:[%s168 + $0x268] sm:$0x3f] %v1631
        %1828 = vst [vmem:[%s168 + $0x270] sm:$0x3f] %v1632
        %1829 = vst [vmem:[%s168 + $0x278] sm:$0x3f] %v1633
        %1830 = vst [vmem:[%s168 + $0x280] sm:$0x3f] %v1634
        %1831 = vst [vmem:[%s168 + $0x288] sm:$0x3f] %v1635
        %1832 = vst [vmem:[%s168 + $0x290] sm:$0x3f] %v1636
        %1833 = vst [vmem:[%s168 + $0x298] sm:$0x3f] %v1637
        %1834 = vst [vmem:[%s168 + $0x2a0] sm:$0x3f] %v1638
        %1835 = vst [vmem:[%s168 + $0x2a8] sm:$0x3f] %v1639
        %1836 = vst [vmem:[%s168 + $0x2b0] sm:$0x3f] %v1640
        %1837 = vst [vmem:[%s168 + $0x2b8] sm:$0x3f] %v1641
        %1838 = vst [vmem:[%s168 + $0x2c0] sm:$0x3f] %v1642
        %1839 = vst [vmem:[%s168 + $0x2c8] sm:$0x3f] %v1643
        %1840 = vst [vmem:[%s168 + $0x2d0] sm:$0x3f] %v1644
        %1841 = vst [vmem:[%s168 + $0x2d8] sm:$0x3f] %v1645
        %1842 = vst [vmem:[%s168 + $0x2e0] sm:$0x3f] %v1646
        %1843 = vst [vmem:[%s168 + $0x2e8] sm:$0x3f] %v1647
        %1844 = vst [vmem:[%s168 + $0x2f0] sm:$0x3f] %v1648
        %1845 = vst [vmem:[%s168 + $0x2f8] sm:$0x3f] %v1649
        %1846 = vst [vmem:[%s168 + $0x300] sm:$0x3f] %v1650
        %1847 = vst [vmem:[%s168 + $0x308] sm:$0x3f] %v1651
        %1848 = vst [vmem:[%s168 + $0x310] sm:$0x3f] %v1652
        %1849 = vst [vmem:[%s168 + $0x318] sm:$0x3f] %v1653
        %1850 = vst [vmem:[%s168 + $0x320] sm:$0x3f] %v1654
        %1851 = vst [vmem:[%s168 + $0x328] sm:$0x3f] %v1655
        %1852 = vst [vmem:[%s168 + $0x330] sm:$0x3f] %v1656
        %1853 = vst [vmem:[%s168 + $0x338] sm:$0x3f] %v1657
        %1854 = vst [vmem:[%s168 + $0x340] sm:$0x3f] %v1658
        %1855 = vst [vmem:[%s168 + $0x348] sm:$0x3f] %v1659
        %1856 = vst [vmem:[%s168 + $0x350] sm:$0x3f] %v1660
        %1857 = vst [vmem:[%s168 + $0x358] sm:$0x3f] %v1661
        %1858 = vst [vmem:[%s168 + $0x360] sm:$0x3f] %v1662
        %1859 = vst [vmem:[%s168 + $0x368] sm:$0x3f] %v1663
        %1860 = vst [vmem:[%s168 + $0x370] sm:$0x3f] %v1664
        %1861 = vst [vmem:[%s168 + $0x378] sm:$0x3f] %v1665
        %1862 = vst [vmem:[%s168 + $0x380] sm:$0x3f] %v1666
        %1863 = vst [vmem:[%s168 + $0x388] sm:$0x3f] %v1667
        %1864 = vst [vmem:[%s168 + $0x390] sm:$0x3f] %v1668
        %1865 = vst [vmem:[%s168 + $0x398] sm:$0x3f] %v1669
        %1866 = vst [vmem:[%s168 + $0x3a0] sm:$0x3f] %v1670
        %1867 = vst [vmem:[%s168 + $0x3a8] sm:$0x3f] %v1671
        %1868 = vst [vmem:[%s168 + $0x3b0] sm:$0x3f] %v1672
        %1869 = vst [vmem:[%s168 + $0x3b8] sm:$0x3f] %v1673
        %1870 = vst [vmem:[%s168 + $0x3c0] sm:$0x3f] %v1674
        %1871 = vst [vmem:[%s168 + $0x3c8] sm:$0x3f] %v1675
        %1872 = vst [vmem:[%s168 + $0x3d0] sm:$0x3f] %v1676
        %1873 = vst [vmem:[%s168 + $0x3d8] sm:$0x3f] %v1677
        %1874 = vst [vmem:[%s168 + $0x3e0] sm:$0x3f] %v1678
        %1875 = vst [vmem:[%s168 + $0x3e8] sm:$0x3f] %v1679
        %1876 = vst [vmem:[%s168 + $0x3f0] sm:$0x3f] %v1680
        %1877 = vst [vmem:[%s168 + $0x3f8] sm:$0x3f] %v1681
        %1878 = vst [vmem:[%s168 + $0x400] sm:$0x3f] %v1682
        %1879 = vst [vmem:[%s168 + $0x408] sm:$0x3f] %v1683
        %1880 = vst [vmem:[%s168 + $0x410] sm:$0x3f] %v1684
        %1881 = vst [vmem:[%s168 + $0x418] sm:$0x3f] %v1685
        %1882 = vst [vmem:[%s168 + $0x420] sm:$0x3f] %v1686
        %1883 = vst [vmem:[%s168 + $0x428] sm:$0x3f] %v1687
        %1884 = vst [vmem:[%s168 + $0x430] sm:$0x3f] %v1688
        %1885 = vst [vmem:[%s168 + $0x438] sm:$0x3f] %v1689
        %1886 = vst [vmem:[%s168 + $0x440] sm:$0x3f] %v1690
        %1887 = vst [vmem:[%s168 + $0x448] sm:$0x3f] %v1691
        %1888 = vst [vmem:[%s168 + $0x450] sm:$0x3f] %v1692
        %1889 = vst [vmem:[%s168 + $0x458] sm:$0x3f] %v1693
        %1890 = vst [vmem:[%s168 + $0x460] sm:$0x3f] %v1694
        %1891 = vst [vmem:[%s168 + $0x468] sm:$0x3f] %v1695
        %1892 = vst [vmem:[%s168 + $0x470] sm:$0x3f] %v1696
        %1893 = vst [vmem:[%s168 + $0x478] sm:$0x3f] %v1697
        %1894 = vst [vmem:[%s168 + $0x480] sm:$0x3f] %v1698
        %1895 = vst [vmem:[%s168 + $0x488] sm:$0x3f] %v1699
        %1896 = vst [vmem:[%s168 + $0x490] sm:$0x3f] %v1700
        %1897 = vst [vmem:[%s168 + $0x498] sm:$0x3f] %v1701
        %1898 = vst [vmem:[%s168 + $0x4a0] sm:$0x3f] %v1702
        %1899 = vst [vmem:[%s168 + $0x4a8] sm:$0x3f] %v1703
        %1900 = vst [vmem:[%s168 + $0x4b0] sm:$0x3f] %v1704
        %1901 = vst [vmem:[%s168 + $0x4b8] sm:$0x3f] %v1705
        %1902 = vst [vmem:[%s168 + $0x4c0] sm:$0x3f] %v1706
        %1903 = vst [vmem:[%s168 + $0x4c8] sm:$0x3f] %v1707
        %1904 = vst [vmem:[%s168 + $0x4d0] sm:$0x3f] %v1708
        %1905 = vst [vmem:[%s168 + $0x4d8] sm:$0x3f] %v1709
        %1906 = vst [vmem:[%s168 + $0x4e0] sm:$0x3f] %v1710
        %1907 = vst [vmem:[%s168 + $0x4e8] sm:$0x3f] %v1711
        %1908 = vst [vmem:[%s168 + $0x4f0] sm:$0x3f] %v1712
        %1909 = vst [vmem:[%s168 + $0x4f8] sm:$0x3f] %v1713
        %1910 = vst [vmem:[%s168 + $0x500] sm:$0x3f] %v1714
        %1911 = vst [vmem:[%s168 + $0x508] sm:$0x3f] %v1715
        %1912 = vst [vmem:[%s168 + $0x510] sm:$0x3f] %v1716
        %1913 = vst [vmem:[%s168 + $0x518] sm:$0x3f] %v1717
        %1914 = vst [vmem:[%s168 + $0x520] sm:$0x3f] %v1718
        %1915 = vst [vmem:[%s168 + $0x528] sm:$0x3f] %v1719
        %1916 = vst [vmem:[%s168 + $0x530] sm:$0x3f] %v1720
        %1917 = vst [vmem:[%s168 + $0x538] sm:$0x3f] %v1721
        %1918 = vst [vmem:[%s168 + $0x540] sm:$0x3f] %v1722
        %1919 = vst [vmem:[%s168 + $0x548] sm:$0x3f] %v1723
        %1920 = vst [vmem:[%s168 + $0x550] sm:$0x3f] %v1724
        %1921 = vst [vmem:[%s168 + $0x558] sm:$0x3f] %v1725
        %1922 = vst [vmem:[%s168 + $0x560] sm:$0x3f] %v1726
        %1923 = vst [vmem:[%s168 + $0x568] sm:$0x3f] %v1727
        %1924 = vst [vmem:[%s168 + $0x570] sm:$0x3f] %v1728
        %1925 = vst [vmem:[%s168 + $0x578] sm:$0x3f] %v1729
        %1926 = vst [vmem:[%s168 + $0x580] sm:$0x3f] %v1730
        %1927 = vst [vmem:[%s168 + $0x588] sm:$0x3f] %v1731
        %1928 = vst [vmem:[%s168 + $0x590] sm:$0x3f] %v1732
        %1929 = vst [vmem:[%s168 + $0x598] sm:$0x3f] %v1733
        %1930 = vst [vmem:[%s168 + $0x5a0] sm:$0x3f] %v1734
        %1931 = vst [vmem:[%s168 + $0x5a8] sm:$0x3f] %v1735
        %1932 = vst [vmem:[%s168 + $0x5b0] sm:$0x3f] %v1736
        %1933 = vst [vmem:[%s168 + $0x5b8] sm:$0x3f] %v1737
        %1934 = vst [vmem:[%s168 + $0x5c0] sm:$0x3f] %v1738
        %1935 = vst [vmem:[%s168 + $0x5c8] sm:$0x3f] %v1739
        %1936 = vst [vmem:[%s168 + $0x5d0] sm:$0x3f] %v1740
        %1937 = vst [vmem:[%s168 + $0x5d8] sm:$0x3f] %v1741
        %1938 = vst [vmem:[%s168 + $0x5e0] sm:$0x3f] %v1742
        %1939 = vst [vmem:[%s168 + $0x5e8] sm:$0x3f] %v1743
        %1940 = vst [vmem:[%s168 + $0x5f0] sm:$0x3f] %v1744
        %1941 = vst [vmem:[%s168 + $0x5f8] sm:$0x3f] %v1745
        %1942 = vst [vmem:[%s168 + $0x600] sm:$0x3f] %v1746
        %1943 = vst [vmem:[%s168 + $0x608] sm:$0x3f] %v1747
        %1944 = vst [vmem:[%s168 + $0x610] sm:$0x3f] %v1748
        %1945 = vst [vmem:[%s168 + $0x618] sm:$0x3f] %v1749
      $region32: #{crop_forward.1} parent=23 // pred_fallthru
        _
      %s1946 = smul.u32 196, %s17
      %p1947 = scmp.lt.s32.totalorder %s16, 0
      %s1948 = scalar_select %p1947, %s16, 0
      %p1949 = scmp.lt.s32.totalorder %s1946, 391
      %s1950 = scalar_select %p1949, %s1946, 391
      %s1951 = smul.addr %s1948, 392
      %s1952 = sadd.s32 %s1950, %s1951
      %s1953 = smul.addr %s1952, 8
      %s1954 = scalar_lea.vmem %s1, %s1953
      // Predicated region
      $region33: #{crop_forward.1} parent=23 // pred_check
        %p1955 = pneg %p76
      $region34: #{crop_forward.1} parent=23 // pred_check_branch
        %1957 = sbr.rel (%p1955) target = $region36
      $region35: #{crop_forward.1} parent=23 // pred_region
        %s1958 = smul.u32 196, %s17
      $region36: #{crop_forward.1} parent=23 // pred_fallthru
        _
    $region24: #{crop_forward.1} parent=5 // pred_fallthru
      _
    %p1959 = scmp.le.s32.totalorder 2, %s7
    // Predicated region
    $region37: #{crop_forward.1} parent=5 // pred_check
      %p1960 = pneg %p1959
    $region38: #{crop_forward.1} parent=5 // pred_check_branch
      %1962 = sbr.rel (%p1960) target = $region40
    $region39: #{crop_forward.1} parent=5 // pred_region
      %s1963 = ssub.s32 %s7, 2
      // Predicated region
      $region41: #{crop_forward.1} parent=39 // pred_check
        %p1964 = pneg %p82
      $region42: #{crop_forward.1} parent=39 // pred_check_branch
        %1966 = sbr.rel (%p1964) target = $region44
      $region43: #{crop_forward.1} parent=39 // pred_region
        %s1967 = smul.u32 196, %s19
        %p1968 = scmp.lt.s32.totalorder %s18, 0
        %s1969 = scalar_select %p1968, %s18, 0
        %p1970 = scmp.lt.s32.totalorder %s1967, 391
        %s1971 = scalar_select %p1970, %s1967, 391
        %s1972 = smul.addr %s1969, 392
        %s1973 = sadd.s32 %s1971, %s1972
        %s1974 = smul.addr %s1973, 8
        %s1975 = scalar_lea.vmem %s1, %s1974
      $region44: #{crop_forward.1} parent=39 // pred_fallthru
        _
    $region40: #{crop_forward.1} parent=5 // pred_fallthru
      _
  $region6: #{crop_forward.1} parent=0 // loop_footer
    %s11 = sadd.s32 1, %s7
  $region7: #{crop_forward.1} parent=0 // loop_footer_branch
    %6 = sbr.rel target = $region3
  $region8: #{crop_forward.1} parent=0 // loop_exit
    _

</llo_original>
